<compile_context>
chip_gen: v7x
topology: tpu7x:2x2x1
jax: 0.10.0
libtpu: 0.0.40
codegen_flags: <defaults>
</compile_context>

<pallas_src>
import functools
import math

import jax
import jax.numpy as jnp
from jax.experimental import pallas as pl
from jax.experimental.pallas import tpu as pltpu


# ---------------------------------------------------------------------------
# Kernel bodies
# ---------------------------------------------------------------------------
def _sdpa_kernel(q_ref, k_ref, v_ref, out_ref, attn_ref, *, scale):
    # q_ref: (BB, TQ, Dk); k_ref/v_ref: (BB, S, Dk)
    # out_ref: (BB, TQ, Dk); attn_ref: (BB, TQ, S)
    q = q_ref[...]
    k = k_ref[...]
    v = v_ref[...]

    # scores = Q @ K^T / sqrt(d_k): contract head dims directly (no explicit K
    # transpose/relayout), f32 accumulation on the MXU, scale the f32 scores
    # (keeps parity with PyTorch also for low-precision inputs).
    scores = jnp.einsum("bqd,bkd->bqk", q, k,
                        preferred_element_type=jnp.float32) * scale

    # Numerically-stable row-wise softmax over the full (resident) key axis.
    m = jnp.max(scores, axis=-1, keepdims=True)
    p = jnp.exp(scores - m)
    denom = jnp.sum(p, axis=-1, keepdims=True)
    attn = p * pl.reciprocal(denom, approx=False)

    # Cast the (largest) attn tile once; reuse it for both the store and P@V.
    attn_lo = attn.astype(attn_ref.dtype)
    attn_ref[...] = attn_lo
    pv_lhs = attn_lo if attn_lo.dtype == v.dtype else attn.astype(v.dtype)
    out = jnp.einsum("bqk,bkd->bqd", pv_lhs, v,
                     preferred_element_type=jnp.float32)
    out_ref[...] = out.astype(out_ref.dtype)


def _sdpa_kernel_noattn(q_ref, k_ref, v_ref, out_ref, *, scale):
    q = q_ref[...]
    k = k_ref[...]
    v = v_ref[...]
    scores = jnp.einsum("bqd,bkd->bqk", q, k,
                        preferred_element_type=jnp.float32) * scale
    m = jnp.max(scores, axis=-1, keepdims=True)
    p = jnp.exp(scores - m)
    denom = jnp.sum(p, axis=-1, keepdims=True)
    attn = p * pl.reciprocal(denom, approx=False)
    out = jnp.einsum("bqk,bkd->bqd", attn.astype(v.dtype), v,
                     preferred_element_type=jnp.float32)
    out_ref[...] = out.astype(out_ref.dtype)


# ---------------------------------------------------------------------------
# Sizing helpers (trace-time Python)
# ---------------------------------------------------------------------------
def _ceil_to(x, m):
    return -(-x // m) * m


def _tpu_vmem_and_gen():
    """Return (physical VMEM bytes per core, generation tag)."""
    vmem = None
    try:
        vmem = int(pltpu.get_tpu_info().vmem_capacity_bytes)
    except Exception:
        vmem = None
    gen = "unknown"
    try:
        kind = jax.devices()[0].device_kind.lower()
        if "v7" in kind or "7x" in kind:
            gen = "v7x"
        elif "v6" in kind:
            gen = "v6e"
        elif "v5 lite" in kind or "v5e" in kind or "v5lite" in kind:
            gen = "v5e"
    except Exception:
        pass
    if vmem is None:
        # Conservative defaults: 64 MiB on v7x / unknown, 128 MiB on v5e/v6e.
        vmem = 128 * 1024 * 1024 if gen in ("v5e", "v6e") else 64 * 1024 * 1024
    return vmem, gen


def _divisors_desc(n, limit):
    limit = max(1, min(n, limit))
    return [d for d in range(limit, 0, -1) if n % d == 0]


def _step_bytes(BB, TQ, *, S, Dk, itemsize, sublane, kv_bufs, with_attn):
    """Per-grid-step VMEM working set (lane/sublane padded, incl. buffering)."""
    lane = 128
    dk_pad = _ceil_to(Dk, lane)
    s_lane = _ceil_to(S, lane)
    s_sub = _ceil_to(S, sublane)
    tq_pad = _ceil_to(TQ, sublane)
    q_b = 2 * BB * tq_pad * dk_pad * itemsize               # Q, double-buffered
    kv_b = 2 * kv_bufs * BB * s_sub * dk_pad * itemsize     # K + V
    out_b = 2 * BB * tq_pad * dk_pad * itemsize             # out, double-buffered
    attn_b = 2 * BB * tq_pad * s_lane * itemsize if with_attn else 0
    tmp_b = 3 * BB * tq_pad * s_lane * 4                    # scores / p / attn (f32)
    return q_b + kv_b + out_b + attn_b + tmp_b


def _choose_tiles(BH, S, Dk, itemsize, sublane, budget, kv_bufs, with_attn, gen):
    """Pick (BB, TQ) dividing (BH, S) whose working set fits `budget`."""
    tq_target = S if S <= 128 else (128 if gen == "v5e" else 256)
    bb_target = 8 if BH >= 16 else max(1, BH // 2)
    bb_cands = _divisors_desc(BH, bb_target)

    if S <= 128:
        primary, fallback = [S], []
    else:
        limit = max(tq_target, 128)
        divs = _divisors_desc(S, limit)
        primary = [d for d in divs if d % 128 == 0]          # MXU/lane aligned
        fallback = [d for d in divs
                    if d not in primary and (d % sublane == 0 or d == S)]
        if not primary and not fallback:
            fallback = [S]                                    # full axis always legal

    fits = functools.partial(_step_bytes, S=S, Dk=Dk, itemsize=itemsize,
                             sublane=sublane, kv_bufs=kv_bufs,
                             with_attn=with_attn)
    for tq_list in (primary, fallback):
        for bb in bb_cands:
            for tq in tq_list:
                if fits(bb, tq) <= budget:
                    return bb, tq
    # Nothing fits: take the smallest tile and let Mosaic deal with it.
    # TODO(synk): add an innermost K-tile grid axis with online-softmax
    # accumulators for very long sequences (needed on v7x's 64 MiB VMEM).
    all_tq = (primary + fallback) or [S]
    return bb_cands[-1], all_tq[-1]


# ---------------------------------------------------------------------------
# Public wrapper
# ---------------------------------------------------------------------------
def scaled_dot_product_attention(Q, K, V, d_k, return_attention=True):
    """Q, K, V: [B, H, S, d_k]. Returns (output, attention) like the PyTorch module
    (or just output if return_attention=False, skipping the B*H*S^2 writeback)."""
    B, H, S, Dk = Q.shape
    assert K.shape == (B, H, S, Dk) and V.shape == (B, H, S, Dk)
    BH = B * H
    scale = 1.0 / math.sqrt(float(d_k))
    dtype = Q.dtype
    itemsize = jnp.dtype(dtype).itemsize
    sublane = max(8, 32 // max(itemsize, 1))   # f32->8, bf16->16, int8->32

    qf = Q.reshape(BH, S, Dk)
    kf = K.reshape(BH, S, Dk)
    vf = V.reshape(BH, S, Dk)

    vmem_cap, gen = _tpu_vmem_and_gen()
    # Request ~75% of physical VMEM: ~48 MiB on v7x (64 MiB/TC), ~96 MiB on
    # v5e/v6e (128 MiB).  Leave extra headroom inside it for Mosaic scratch.
    vmem_limit = int(max(32 * 1024 * 1024,
                         min((vmem_cap * 3) // 4, 96 * 1024 * 1024)))
    budget = vmem_limit - 8 * 1024 * 1024

    bytes_accessed = 4 * BH * S * Dk * itemsize           # Q,K,V reads + out write
    if return_attention:
        bytes_accessed += BH * S * S * itemsize           # attention writeback
    cost = pl.CostEstimate(flops=4 * BH * S * S * Dk,
                           transcendentals=BH * S * S,
                           bytes_accessed=int(bytes_accessed))

    def _run(single_buffer_kv):
        kv_bufs = 1 if single_buffer_kv else 2
        BB, TQ = _choose_tiles(BH, S, Dk, itemsize, sublane, budget,
                               kv_bufs, return_attention, gen)
        grid = (BH // BB, S // TQ)
        # Megacore: shard the independent BH axis ("parallel") so the full-K/V
        # block stays resident per core across the qi axis ("arbitrary", its
        # block index does not change K/V).  If BH collapses to one step, let
        # the qi axis be the parallel one instead.
        dims = ("parallel", "arbitrary") if grid[0] >= 2 else ("arbitrary", "parallel")

        kv_kwargs = {}
        if single_buffer_kv:
            # K/V block index only changes with the outer b axis; single-buffer
            # them to halve their VMEM footprint (no re-fetch across qi anyway).
            kv_kwargs = dict(pipeline_mode=pl.Buffered(1))

        in_specs = [
            pl.BlockSpec((BB, TQ, Dk), lambda b, qi: (b, qi, 0)),            # Q tile
            pl.BlockSpec((BB, S, Dk), lambda b, qi: (b, 0, 0), **kv_kwargs),  # full K
            pl.BlockSpec((BB, S, Dk), lambda b, qi: (b, 0, 0), **kv_kwargs),  # full V
        ]
        if return_attention:
            kernel = functools.partial(_sdpa_kernel, scale=scale)
            out_shape = (jax.ShapeDtypeStruct((BH, S, Dk), dtype),
                         jax.ShapeDtypeStruct((BH, S, S), dtype))
            out_specs = (pl.BlockSpec((BB, TQ, Dk), lambda b, qi: (b, qi, 0)),
                         pl.BlockSpec((BB, TQ, S), lambda b, qi: (b, qi, 0)))
        else:
            kernel = functools.partial(_sdpa_kernel_noattn, scale=scale)
            out_shape = jax.ShapeDtypeStruct((BH, S, Dk), dtype)
            out_specs = pl.BlockSpec((BB, TQ, Dk), lambda b, qi: (b, qi, 0))

        return pl.pallas_call(
            kernel,
            out_shape=out_shape,
            grid_spec=pltpu.PrefetchScalarGridSpec(
                num_scalar_prefetch=0,
                grid=grid,
                in_specs=in_specs,
                out_specs=out_specs,
            ),
            compiler_params=pltpu.CompilerParams(
                dimension_semantics=dims,
                vmem_limit_bytes=vmem_limit,
            ),
            cost_estimate=cost,
        )(qf, kf, vf)

    try:
        result = _run(single_buffer_kv=True)
    except Exception:
        # Single-buffered K/V (pl.Buffered(1)) not supported in this config:
        # retry with default double-buffering (tiles re-sized for 2 K/V bufs).
        result = _run(single_buffer_kv=False)

    if return_attention:
        out_f, attn_f = result
        return out_f.reshape(B, H, S, Dk), attn_f.reshape(B, H, S, S)
    return result.reshape(B, H, S, Dk)


def _reference(Q, K, V, d_k):
    scores = jnp.matmul(Q, jnp.swapaxes(K, -1, -2)) / jnp.sqrt(jnp.float32(d_k))
    attn = jax.nn.softmax(scores, axis=-1)
    out = jnp.matmul(attn, V)
    return out, attn


if __name__ == "__main__":
    B, H, S, d_k = 2, 4, 8, 32
    key = jax.random.PRNGKey(0)
    kq, kk, kv = jax.random.split(key, 3)
    Q = jax.random.normal(kq, (B, H, S, d_k), dtype=jnp.float32)
    K = jax.random.normal(kk, (B, H, S, d_k), dtype=jnp.float32)
    V = jax.random.normal(kv, (B, H, S, d_k), dtype=jnp.float32)

    out, attn = scaled_dot_product_attention(Q, K, V, d_k)
    jax.block_until_ready((out, attn))

    out_ref, attn_ref = _reference(Q, K, V, d_k)
    assert jnp.allclose(attn, attn_ref, atol=2e-5, rtol=2e-5), "attention mismatch"
    assert jnp.allclose(out, out_ref, atol=2e-5, rtol=2e-5), "output mismatch"

    print("KERNEL_OK")
</pallas_src>

<mosaic_0001>
module attributes {stable_mosaic.version = 11 : i64} {
  func.func @_sdpa_kernel(%arg0: i32, %arg1: i32, %arg2: memref<4x8x32xf32, #tpu.memory_space<vmem>>, %arg3: memref<4x8x32xf32, #tpu.memory_space<vmem>>, %arg4: memref<4x8x32xf32, #tpu.memory_space<vmem>>, %arg5: memref<4x8x32xf32, #tpu.memory_space<vmem>>, %arg6: memref<4x8x8xf32, #tpu.memory_space<vmem>>) attributes {dimension_semantics = [#tpu.dimension_semantics<parallel>, #tpu.dimension_semantics<arbitrary>], iteration_bounds = array<i64: 2, 1>, scalar_prefetch = 0 : i64, scratch_operands = 0 : i64, tpu.core_type = #tpu.core_type<tc>, window_params = [{transform_indices = @transform_0, window_bounds = array<i64: 4, 8, 32>}, {pipeline_mode = #tpu.pipeline_mode<synchronous>, transform_indices = @transform_1, window_bounds = array<i64: 4, 8, 32>}, {pipeline_mode = #tpu.pipeline_mode<synchronous>, transform_indices = @transform_2, window_bounds = array<i64: 4, 8, 32>}, {transform_indices = @transform_3, window_bounds = array<i64: 4, 8, 32>}, {transform_indices = @transform_4, window_bounds = array<i64: 4, 8, 8>}]} {
    %c0 = arith.constant 0 : index
    %c0_0 = arith.constant 0 : index
    %c0_1 = arith.constant 0 : index
    %0 = vector.load %arg2[%c0, %c0_0, %c0_1] : memref<4x8x32xf32, #tpu.memory_space<vmem>>, vector<4x8x32xf32>
    %c0_2 = arith.constant 0 : index
    %c0_3 = arith.constant 0 : index
    %c0_4 = arith.constant 0 : index
    %1 = vector.load %arg3[%c0_2, %c0_3, %c0_4] : memref<4x8x32xf32, #tpu.memory_space<vmem>>, vector<4x8x32xf32>
    %c0_5 = arith.constant 0 : index
    %c0_6 = arith.constant 0 : index
    %c0_7 = arith.constant 0 : index
    %2 = vector.load %arg4[%c0_5, %c0_6, %c0_7] : memref<4x8x32xf32, #tpu.memory_space<vmem>>, vector<4x8x32xf32>
    "tpu.trace_start"() <{level = 10 : i32, message = "bqd,bkd->bqk"}> : () -> ()
    %cst = arith.constant dense<0.000000e+00> : vector<4x8x8xf32>
    %3 = tpu.matmul %0, %1, %cst {dimension_numbers = #tpu.dot_dimension_numbers<[2], [2], [1], [1], [0, 0, 0, 1, 1, 1], [0], [0]>} : vector<4x8x32xf32>, vector<4x8x32xf32>, vector<4x8x8xf32> -> vector<4x8x8xf32>
    "tpu.trace_stop"() : () -> ()
    %cst_8 = arith.constant 0.176776692 : f32
    %4 = vector.broadcast %cst_8 : f32 to vector<4x8x8xf32>
    %5 = arith.mulf %3, %4 : vector<4x8x8xf32>
    %cst_9 = arith.constant dense<0xFF800000> : vector<4x8xf32>
    %6 = vector.multi_reduction <maximumf>, %5, %cst_9 [2] : vector<4x8x8xf32> to vector<4x8xf32>
    %7 = vector.shape_cast %6 : vector<4x8xf32> to vector<4x8x1xf32>
    %8 = vector.broadcast %7 : vector<4x8x1xf32> to vector<4x8x8xf32>
    %9 = arith.subf %5, %8 : vector<4x8x8xf32>
    %10 = math.exp %9 : vector<4x8x8xf32>
    %cst_10 = arith.constant dense<0.000000e+00> : vector<4x8xf32>
    %11 = vector.multi_reduction <add>, %10, %cst_10 [2] : vector<4x8x8xf32> to vector<4x8xf32>
    %12 = vector.shape_cast %11 : vector<4x8xf32> to vector<4x8x1xf32>
    %13 = tpu.reciprocal %12 : vector<4x8x1xf32> -> vector<4x8x1xf32>
    %14 = vector.broadcast %13 : vector<4x8x1xf32> to vector<4x8x8xf32>
    %15 = arith.mulf %10, %14 : vector<4x8x8xf32>
    %c0_11 = arith.constant 0 : index
    %c0_12 = arith.constant 0 : index
    %c0_13 = arith.constant 0 : index
    %16 = vector.load %arg6[%c0_11, %c0_12, %c0_13] : memref<4x8x8xf32, #tpu.memory_space<vmem>>, vector<4x8x8xf32>
    tpu.vector_store %arg6[%c0_11, %c0_12, %c0_13], %15 {strides = array<i32>} : memref<4x8x8xf32, #tpu.memory_space<vmem>>, vector<4x8x8xf32>,
    "tpu.trace_start"() <{level = 10 : i32, message = "bqk,bkd->bqd"}> : () -> ()
    %cst_14 = arith.constant dense<0.000000e+00> : vector<4x8x32xf32>
    %17 = tpu.matmul %15, %2, %cst_14 {dimension_numbers = #tpu.dot_dimension_numbers<[2], [1], [1], [2], [0, 0, 0, 1, 1, 2], [0], [0]>} : vector<4x8x8xf32>, vector<4x8x32xf32>, vector<4x8x32xf32> -> vector<4x8x32xf32>
    "tpu.trace_stop"() : () -> ()
    %c0_15 = arith.constant 0 : index
    %c0_16 = arith.constant 0 : index
    %c0_17 = arith.constant 0 : index
    %18 = vector.load %arg5[%c0_15, %c0_16, %c0_17] : memref<4x8x32xf32, #tpu.memory_space<vmem>>, vector<4x8x32xf32>
    tpu.vector_store %arg5[%c0_15, %c0_16, %c0_17], %17 {strides = array<i32>} : memref<4x8x32xf32, #tpu.memory_space<vmem>>, vector<4x8x32xf32>,
    return
  }
  func.func @transform_0(%arg0: i32, %arg1: i32) -> (i32, i32, i32) {
    %c0_i32 = arith.constant 0 : i32
    %c0_i32_0 = arith.constant 0 : i32
    return %arg0, %arg1, %c0_i32 : i32, i32, i32
  }
  func.func @transform_1(%arg0: i32, %arg1: i32) -> (i32, i32, i32) {
    %c0_i32 = arith.constant 0 : i32
    %c0_i32_0 = arith.constant 0 : i32
    %c0_i32_1 = arith.constant 0 : i32
    return %arg0, %c0_i32, %c0_i32_0 : i32, i32, i32
  }
  func.func @transform_2(%arg0: i32, %arg1: i32) -> (i32, i32, i32) {
    %c0_i32 = arith.constant 0 : i32
    %c0_i32_0 = arith.constant 0 : i32
    %c0_i32_1 = arith.constant 0 : i32
    return %arg0, %c0_i32, %c0_i32_0 : i32, i32, i32
  }
  func.func @transform_3(%arg0: i32, %arg1: i32) -> (i32, i32, i32) {
    %c0_i32 = arith.constant 0 : i32
    %c0_i32_0 = arith.constant 0 : i32
    return %arg0, %arg1, %c0_i32 : i32, i32, i32
  }
  func.func @transform_4(%arg0: i32, %arg1: i32) -> (i32, i32, i32) {
    %c0_i32 = arith.constant 0 : i32
    %c0_i32_0 = arith.constant 0 : i32
    return %arg0, %arg1, %c0_i32 : i32, i32, i32
  }
}

module attributes {stable_mosaic.version = 11 : i64} {
  func.func @_sdpa_kernel(%arg0: i32, %arg1: i32, %arg2: memref<4x8x32xf32, #tpu.memory_space<vmem>>, %arg3: memref<4x8x32xf32, #tpu.memory_space<vmem>>, %arg4: memref<4x8x32xf32, #tpu.memory_space<vmem>>, %arg5: memref<4x8x32xf32, #tpu.memory_space<vmem>>, %arg6: memref<4x8x8xf32, #tpu.memory_space<vmem>>) attributes {dimension_semantics = [#tpu.dimension_semantics<parallel>, #tpu.dimension_semantics<arbitrary>], iteration_bounds = array<i64: 2, 1>, scalar_prefetch = 0 : i64, scratch_operands = 0 : i64, tpu.core_type = #tpu.core_type<tc>, window_params = [{transform_indices = @transform_0, window_bounds = array<i64: 4, 8, 32>}, {transform_indices = @transform_1, window_bounds = array<i64: 4, 8, 32>}, {transform_indices = @transform_2, window_bounds = array<i64: 4, 8, 32>}, {transform_indices = @transform_3, window_bounds = array<i64: 4, 8, 32>}, {transform_indices = @transform_4, window_bounds = array<i64: 4, 8, 8>}]} {
    %c0 = arith.constant 0 : index
    %c0_0 = arith.constant 0 : index
    %c0_1 = arith.constant 0 : index
    %0 = vector.load %arg2[%c0, %c0_0, %c0_1] : memref<4x8x32xf32, #tpu.memory_space<vmem>>, vector<4x8x32xf32>
    %c0_2 = arith.constant 0 : index
    %c0_3 = arith.constant 0 : index
    %c0_4 = arith.constant 0 : index
    %1 = vector.load %arg3[%c0_2, %c0_3, %c0_4] : memref<4x8x32xf32, #tpu.memory_space<vmem>>, vector<4x8x32xf32>
    %c0_5 = arith.constant 0 : index
    %c0_6 = arith.constant 0 : index
    %c0_7 = arith.constant 0 : index
    %2 = vector.load %arg4[%c0_5, %c0_6, %c0_7] : memref<4x8x32xf32, #tpu.memory_space<vmem>>, vector<4x8x32xf32>
    "tpu.trace_start"() <{level = 10 : i32, message = "bqd,bkd->bqk"}> : () -> ()
    %cst = arith.constant dense<0.000000e+00> : vector<4x8x8xf32>
    %3 = tpu.matmul %0, %1, %cst {dimension_numbers = #tpu.dot_dimension_numbers<[2], [2], [1], [1], [0, 0, 0, 1, 1, 1], [0], [0]>} : vector<4x8x32xf32>, vector<4x8x32xf32>, vector<4x8x8xf32> -> vector<4x8x8xf32>
    "tpu.trace_stop"() : () -> ()
    %cst_8 = arith.constant 0.176776692 : f32
    %4 = vector.broadcast %cst_8 : f32 to vector<4x8x8xf32>
    %5 = arith.mulf %3, %4 : vector<4x8x8xf32>
    %cst_9 = arith.constant dense<0xFF800000> : vector<4x8xf32>
    %6 = vector.multi_reduction <maximumf>, %5, %cst_9 [2] : vector<4x8x8xf32> to vector<4x8xf32>
    %7 = vector.shape_cast %6 : vector<4x8xf32> to vector<4x8x1xf32>
    %8 = vector.broadcast %7 : vector<4x8x1xf32> to vector<4x8x8xf32>
    %9 = arith.subf %5, %8 : vector<4x8x8xf32>
    %10 = math.exp %9 : vector<4x8x8xf32>
    %cst_10 = arith.constant dense<0.000000e+00> : vector<4x8xf32>
    %11 = vector.multi_reduction <add>, %10, %cst_10 [2] : vector<4x8x8xf32> to vector<4x8xf32>
    %12 = vector.shape_cast %11 : vector<4x8xf32> to vector<4x8x1xf32>
    %13 = tpu.reciprocal %12 : vector<4x8x1xf32> -> vector<4x8x1xf32>
    %14 = vector.broadcast %13 : vector<4x8x1xf32> to vector<4x8x8xf32>
    %15 = arith.mulf %10, %14 : vector<4x8x8xf32>
    %c0_11 = arith.constant 0 : index
    %c0_12 = arith.constant 0 : index
    %c0_13 = arith.constant 0 : index
    %16 = vector.load %arg6[%c0_11, %c0_12, %c0_13] : memref<4x8x8xf32, #tpu.memory_space<vmem>>, vector<4x8x8xf32>
    tpu.vector_store %arg6[%c0_11, %c0_12, %c0_13], %15 {strides = array<i32>} : memref<4x8x8xf32, #tpu.memory_space<vmem>>, vector<4x8x8xf32>,
    "tpu.trace_start"() <{level = 10 : i32, message = "bqk,bkd->bqd"}> : () -> ()
    %cst_14 = arith.constant dense<0.000000e+00> : vector<4x8x32xf32>
    %17 = tpu.matmul %15, %2, %cst_14 {dimension_numbers = #tpu.dot_dimension_numbers<[2], [1], [1], [2], [0, 0, 0, 1, 1, 2], [0], [0]>} : vector<4x8x8xf32>, vector<4x8x32xf32>, vector<4x8x32xf32> -> vector<4x8x32xf32>
    "tpu.trace_stop"() : () -> ()
    %c0_15 = arith.constant 0 : index
    %c0_16 = arith.constant 0 : index
    %c0_17 = arith.constant 0 : index
    %18 = vector.load %arg5[%c0_15, %c0_16, %c0_17] : memref<4x8x32xf32, #tpu.memory_space<vmem>>, vector<4x8x32xf32>
    tpu.vector_store %arg5[%c0_15, %c0_16, %c0_17], %17 {strides = array<i32>} : memref<4x8x32xf32, #tpu.memory_space<vmem>>, vector<4x8x32xf32>,
    return
  }
  func.func @transform_0(%arg0: i32, %arg1: i32) -> (i32, i32, i32) {
    %c0_i32 = arith.constant 0 : i32
    %c0_i32_0 = arith.constant 0 : i32
    return %arg0, %arg1, %c0_i32 : i32, i32, i32
  }
  func.func @transform_1(%arg0: i32, %arg1: i32) -> (i32, i32, i32) {
    %c0_i32 = arith.constant 0 : i32
    %c0_i32_0 = arith.constant 0 : i32
    %c0_i32_1 = arith.constant 0 : i32
    return %arg0, %c0_i32, %c0_i32_0 : i32, i32, i32
  }
  func.func @transform_2(%arg0: i32, %arg1: i32) -> (i32, i32, i32) {
    %c0_i32 = arith.constant 0 : i32
    %c0_i32_0 = arith.constant 0 : i32
    %c0_i32_1 = arith.constant 0 : i32
    return %arg0, %c0_i32, %c0_i32_0 : i32, i32, i32
  }
  func.func @transform_3(%arg0: i32, %arg1: i32) -> (i32, i32, i32) {
    %c0_i32 = arith.constant 0 : i32
    %c0_i32_0 = arith.constant 0 : i32
    return %arg0, %arg1, %c0_i32 : i32, i32, i32
  }
  func.func @transform_4(%arg0: i32, %arg1: i32) -> (i32, i32, i32) {
    %c0_i32 = arith.constant 0 : i32
    %c0_i32_0 = arith.constant 0 : i32
    return %arg0, %arg1, %c0_i32 : i32, i32, i32
  }
}

</mosaic_0001>

<llo_original>
// kernel: tpu_custom_call.1
$region0: #{tpu_custom_call.1}
  #allocation0 [shape = 'u32[]', space=smem, size = 0x4, offset = 0x4, fixed_abs, tag = 'smem constant byte address 0x4 - core index']
  #allocation1 [shape = 'u32[144,128]{1,0:T(1,128)}', space=vmem, size = 0x12000, scoped, tag = 'internal scratch']
  %s0 = inlined_call_operand.hbm [shape: f32[8,8,32], index: 0, kind: input, shape index: {}]
  %s1 = inlined_call_operand.hbm [shape: f32[8,8,32], index: 1, kind: input, shape index: {}]
  %s2 = inlined_call_operand.hbm [shape: f32[8,8,32], index: 2, kind: input, shape index: {}]
  %s3 = inlined_call_operand.hbm [shape: f32[8,8,32], index: 3, kind: output, shape index: {0}]
  %s4 = inlined_call_operand.hbm [shape: f32[8,8,8], index: 4, kind: output, shape index: {1}]
  %5 = xla_tuple %s3, %s4
  %s6 = sld [smem:[#allocation0]]
  $region65: #{tpu_custom_call.1} parent=0
    _
  %s8 = ssub.s32 1, %s6
  %s9 = scalar_select 0, %s8, %s6
  $region1: #{tpu_custom_call.1} parent=0
    #allocation2 [shape = 'u8[32768]{0}', space=vmem, size = 0x8000, scoped, tag = 'input window, operand 0']
    #allocation3 [shape = 's32[2]{0}', space=sflag, size = 0x8, scoped, tag = 'scoped memory for tpu_custom_call.1']
    #allocation4 [shape = 's32[2]{0}', space=sflag, size = 0x8, scoped, tag = 'scoped memory for tpu_custom_call.1']
    #allocation5 [shape = 'u8[16384]{0}', space=vmem, size = 0x4000, scoped, tag = 'input window, operand 1, single buffered']
    #allocation6 [shape = 's32[1]{0}', space=sflag, size = 0x4, scoped, tag = 'scoped memory for tpu_custom_call.1']
    #allocation7 [shape = 'u8[16384]{0}', space=vmem, size = 0x4000, scoped, tag = 'input window, operand 2, single buffered']
    #allocation8 [shape = 'u8[32768]{0}', space=vmem, size = 0x8000, scoped, tag = 'output window, operand 0']
    #allocation9 [shape = 'u8[32768]{0}', space=vmem, size = 0x8000, scoped, tag = 'output window, operand 1']
    #allocation10 [shape = 's32[2]{0}', space=sflag, size = 0x8, scoped, tag = 'scoped memory for tpu_custom_call.1']
    %10 = vsyncpa [#allocation3], 0
    %s11 = scalar_lea.sflag [#allocation3], 1
    %12 = vsyncpa %s11, 0
    %13 = vsyncpa [#allocation6], 0
    %14 = vsyncpa [#allocation4], 0
    %s15 = scalar_lea.sflag [#allocation4], 1
    %16 = vsyncpa %s15, 0
    %17 = vsyncpa [#allocation10], 0
    %s18 = scalar_lea.sflag [#allocation10], 1
    %19 = vsyncpa %s18, 0
    loop: start=0, step=1, limit=4
    $region2: #{tpu_custom_call.1} parent=1 // loop_pre_header
      _
    $region3: #{tpu_custom_call.1} parent=1 // loop_header
      %s21 = sphi 0, %s25
      %p22 = scmp.ge.s32.totalorder %s21, 4
      %s28 = sphi 0, %s40
      %s29 = sphi 0, %s36
      %s30 = sphi 0, %s28
      %s31 = sphi 0, %s29
      %s32 = sphi 0, %s30
      %s33 = sphi 0, %s31
      %s45 = sphi 0, %s47
      %s48 = sphi 0, %s45
      %s49 = sphi 0, %s48
      %s65 = sphi 0, %s49
      %s71 = sphi 0, %s73
      %s74 = sphi 0, %s71
      %s75 = sphi 0, %s74
      %s91 = sphi 0, %s75
      %s97 = sphi 0, %s99
      %s100 = sphi 0, %s97
      %s101 = sphi 0, %s100
      %s117 = sphi 0, %s101
      %s125 = sphi 0, %s127
      %s128 = sphi 0, %s125
      %s129 = sphi 0, %s128
      %s145 = sphi 0, %s129
      %s153 = sphi 0, %s155
      %s156 = sphi 0, %s153
      %s157 = sphi 0, %s156
      %s173 = sphi 0, %s157
    $region4: #{tpu_custom_call.1} parent=1 // loop_header_branch
      %24 = sbr.rel (%p22) target = $region8
    $region5: #{tpu_custom_call.1} parent=1 // loop_body
      %s26 = ssub.s32 %s21, 1
      %s27 = ssub.s32 %s21, 2
      %s34 = sadd.s32 1, %s29
      %p35 = scmp.ge.s32.totalorder %s34, 1
      %s36 = scalar_select %p35, 0, %s34
      %s37 = sadd.s32 1, %s28
      %s38 = scalar_select %p35, %s37, %s28
      %p39 = scmp.ge.s32.totalorder %s38, 2
      %s40 = scalar_select %p39, 0, %s38
      %s41 = ssub.s32 %s28, %s40
      %s42 = ssub.s32 %s29, %s36
      %s43 = sor.u32 %s41, %s42
      %p44 = scmp.eq.s32.totalorder %s43, 0
      %s46 = sadd.s32 %s45, 1
      %s47 = scalar_select %p44, %s45, %s46
      %p50 = pneg %p44
      %p51 = scmp.eq.s32.totalorder %s21, 1
      %p52 = por %p50, %p51
      %p53 = scmp.ne.s32.totalorder %s45, %s48
      %p54 = scmp.eq.s32.totalorder %s21, 0
      %p55 = por %p53, %p54
      %p56 = scmp.ne.s32.totalorder %s45, %s48
      %p57 = scmp.eq.s32.totalorder %s26, 1
      %p58 = por %p56, %p57
      %p59 = scmp.ne.s32.totalorder %s48, %s49
      %p60 = scmp.eq.s32.totalorder %s26, 0
      %p61 = por %p59, %p60
      %p62 = scmp.ne.s32.totalorder %s48, %s49
      %p63 = scmp.eq.s32.totalorder %s27, 1
      %p64 = por %p62, %p63
      %p66 = scmp.ne.s32.totalorder %s49, %s65
      %p67 = scmp.eq.s32.totalorder %s27, 0
      %p68 = por %p66, %p67
      %s69 = ssub.s32 %s28, %s40
      %p70 = scmp.eq.s32.totalorder %s69, 0
      %s72 = sadd.s32 %s71, 1
      %s73 = scalar_select %p70, %s71, %s72
      %p76 = pneg %p70
      %p77 = scmp.eq.s32.totalorder %s21, 1
      %p78 = por %p76, %p77
      %p79 = scmp.ne.s32.totalorder %s71, %s74
      %p80 = scmp.eq.s32.totalorder %s21, 0
      %p81 = por %p79, %p80
      %p82 = scmp.ne.s32.totalorder %s71, %s74
      %p83 = scmp.eq.s32.totalorder %s26, 1
      %p84 = por %p82, %p83
      %p85 = scmp.ne.s32.totalorder %s74, %s75
      %p86 = scmp.eq.s32.totalorder %s26, 0
      %p87 = por %p85, %p86
      %p88 = scmp.ne.s32.totalorder %s74, %s75
      %p89 = scmp.eq.s32.totalorder %s27, 1
      %p90 = por %p88, %p89
      %p92 = scmp.ne.s32.totalorder %s75, %s91
      %p93 = scmp.eq.s32.totalorder %s27, 0
      %p94 = por %p92, %p93
      %s95 = ssub.s32 %s28, %s40
      %p96 = scmp.eq.s32.totalorder %s95, 0
      %s98 = sadd.s32 %s97, 1
      %s99 = scalar_select %p96, %s97, %s98
      %p102 = pneg %p96
      %p103 = scmp.eq.s32.totalorder %s21, 1
      %p104 = por %p102, %p103
      %p105 = scmp.ne.s32.totalorder %s97, %s100
      %p106 = scmp.eq.s32.totalorder %s21, 0
      %p107 = por %p105, %p106
      %p108 = scmp.ne.s32.totalorder %s97, %s100
      %p109 = scmp.eq.s32.totalorder %s26, 1
      %p110 = por %p108, %p109
      %p111 = scmp.ne.s32.totalorder %s100, %s101
      %p112 = scmp.eq.s32.totalorder %s26, 0
      %p113 = por %p111, %p112
      %p114 = scmp.ne.s32.totalorder %s100, %s101
      %p115 = scmp.eq.s32.totalorder %s27, 1
      %p116 = por %p114, %p115
      %p118 = scmp.ne.s32.totalorder %s101, %s117
      %p119 = scmp.eq.s32.totalorder %s27, 0
      %p120 = por %p118, %p119
      %s121 = ssub.s32 %s28, %s40
      %s122 = ssub.s32 %s29, %s36
      %s123 = sor.u32 %s121, %s122
      %p124 = scmp.eq.s32.totalorder %s123, 0
      %s126 = sadd.s32 %s125, 1
      %s127 = scalar_select %p124, %s125, %s126
      %p130 = pneg %p124
      %p131 = scmp.eq.s32.totalorder %s21, 1
      %p132 = por %p130, %p131
      %p133 = scmp.ne.s32.totalorder %s125, %s128
      %p134 = scmp.eq.s32.totalorder %s21, 0
      %p135 = por %p133, %p134
      %p136 = scmp.ne.s32.totalorder %s125, %s128
      %p137 = scmp.eq.s32.totalorder %s26, 1
      %p138 = por %p136, %p137
      %p139 = scmp.ne.s32.totalorder %s128, %s129
      %p140 = scmp.eq.s32.totalorder %s26, 0
      %p141 = por %p139, %p140
      %p142 = scmp.ne.s32.totalorder %s128, %s129
      %p143 = scmp.eq.s32.totalorder %s27, 1
      %p144 = por %p142, %p143
      %p146 = scmp.ne.s32.totalorder %s129, %s145
      %p147 = scmp.eq.s32.totalorder %s27, 0
      %p148 = por %p146, %p147
      %s149 = ssub.s32 %s28, %s40
      %s150 = ssub.s32 %s29, %s36
      %s151 = sor.u32 %s149, %s150
      %p152 = scmp.eq.s32.totalorder %s151, 0
      %s154 = sadd.s32 %s153, 1
      %s155 = scalar_select %p152, %s153, %s154
      %p158 = pneg %p152
      %p159 = scmp.eq.s32.totalorder %s21, 1
      %p160 = por %p158, %p159
      %p161 = scmp.ne.s32.totalorder %s153, %s156
      %p162 = scmp.eq.s32.totalorder %s21, 0
      %p163 = por %p161, %p162
      %p164 = scmp.ne.s32.totalorder %s153, %s156
      %p165 = scmp.eq.s32.totalorder %s26, 1
      %p166 = por %p164, %p165
      %p167 = scmp.ne.s32.totalorder %s156, %s157
      %p168 = scmp.eq.s32.totalorder %s26, 0
      %p169 = por %p167, %p168
      %p170 = scmp.ne.s32.totalorder %s156, %s157
      %p171 = scmp.eq.s32.totalorder %s27, 1
      %p172 = por %p170, %p171
      %p174 = scmp.ne.s32.totalorder %s157, %s173
      %p175 = scmp.eq.s32.totalorder %s27, 0
      %p176 = por %p174, %p175
      %p177 = scmp.le.s32.totalorder 1, %s21
      %p178 = scmp.lt.s32.totalorder %s21, 3
      %p179 = pnand %p177, %p178
      %p180 = pneg %p179
      // Predicated region
      $region9: #{tpu_custom_call.1} parent=5 // pred_check
        _
      $region10: #{tpu_custom_call.1} parent=5 // pred_check_branch
        %182 = sbr.rel (%p179) target = $region12
      $region11: #{tpu_custom_call.1} parent=5 // pred_region
        %s183 = ssub.s32 %s21, 1
        // Predicated region
        $region13: #{tpu_custom_call.1} parent=11 // pred_check
          %p184 = pneg %p87
        $region14: #{tpu_custom_call.1} parent=11 // pred_check_branch
          %186 = sbr.rel (%p184) target = $region16
        $region15: #{tpu_custom_call.1} parent=11 // pred_region
          %s187 = smul.u32 4, %s30
          %s189 = ssub.s32 512, 512
          %190 = vsyncadd [#allocation6], %s189
          %s191 = smul.addr %s187, 128
          %s192 = scalar_lea.hbm %s1, %s191
          %s193 = sshll.u32 [#allocation5], 4
          %s194 = int_to_ptr.vmem [resolvable:$true] %s193
          %199 = dma.hbm_to_vmem [thread:$0]  %s192, 512, %s194, [#allocation6], 128, 128, 8
        $region16: #{tpu_custom_call.1} parent=11 // pred_fallthru
          _
        // Predicated region
        $region17: #{tpu_custom_call.1} parent=11 // pred_check
          %p200 = pneg %p113
        $region18: #{tpu_custom_call.1} parent=11 // pred_check_branch
          %202 = sbr.rel (%p200) target = $region20
        $region19: #{tpu_custom_call.1} parent=11 // pred_region
          %s203 = smul.u32 4, %s30
          %s205 = ssub.s32 512, 512
          %206 = vsyncadd [#allocation6], %s205
          %s207 = smul.addr %s203, 128
          %s208 = scalar_lea.hbm %s2, %s207
          %s209 = sshll.u32 [#allocation7], 4
          %s210 = int_to_ptr.vmem [resolvable:$true] %s209
          %215 = dma.hbm_to_vmem [thread:$0]  %s208, 512, %s210, [#allocation6], 128, 128, 8
        $region20: #{tpu_custom_call.1} parent=11 // pred_fallthru
          _
      $region12: #{tpu_custom_call.1} parent=5 // pred_fallthru
        _
      %p216 = scmp.lt.s32.totalorder %s21, 2
      // Predicated region
      $region21: #{tpu_custom_call.1} parent=5 // pred_check
        %p217 = pneg %p216
      $region22: #{tpu_custom_call.1} parent=5 // pred_check_branch
        %219 = sbr.rel (%p217) target = $region24
      $region23: #{tpu_custom_call.1} parent=5 // pred_region
        // Predicated region
        $region25: #{tpu_custom_call.1} parent=23 // pred_check
          %p220 = pneg %p55
        $region26: #{tpu_custom_call.1} parent=23 // pred_check_branch
          %222 = sbr.rel (%p220) target = $region28
        $region27: #{tpu_custom_call.1} parent=23 // pred_region
          %s223 = sand.u32 %s45, 1
          %s224 = scalar_lea.sflag [#allocation3], %s223
          %s225 = sand.u32 %s45, 1
          %s226 = smul.addr %s225, 32
          %s227 = scalar_lea.vmem [#allocation2], %s226
          %s228 = smul.u32 4, %s28
          %s230 = ssub.s32 512, 512
          %231 = vsyncadd %s224, %s230
          %s232 = sadd.s32 %s29, %s228
          %s233 = smul.addr %s232, 128
          %s234 = scalar_lea.hbm %s0, %s233
          %s235 = sshll.u32 %s227, 4
          %s236 = int_to_ptr.vmem [resolvable:$true] %s235
          %241 = dma.hbm_to_vmem [thread:$0]  %s234, 512, %s236, %s224, 128, 128, 8
        $region28: #{tpu_custom_call.1} parent=23 // pred_fallthru
          _
      $region24: #{tpu_custom_call.1} parent=5 // pred_fallthru
        _
      %p242 = scmp.le.s32.totalorder 1, %s21
      %p243 = scmp.lt.s32.totalorder %s21, 3
      %p244 = pnand %p242, %p243
      %p245 = pneg %p244
      // Predicated region
      $region29: #{tpu_custom_call.1} parent=5 // pred_check
        _
      $region30: #{tpu_custom_call.1} parent=5 // pred_check_branch
        %247 = sbr.rel (%p244) target = $region32
      $region31: #{tpu_custom_call.1} parent=5 // pred_region
        %s248 = ssub.s32 %s21, 1
        %s249 = sand.u32 %s48, 1
        %s250 = scalar_lea.sflag [#allocation3], %s249
        %s251 = sand.u32 %s48, 1
        %s252 = smul.addr %s251, 32
        %s253 = scalar_lea.vmem [#allocation2], %s252
        // Predicated region
        $region33: #{tpu_custom_call.1} parent=31 // pred_check
          %p254 = pneg %p61
        $region34: #{tpu_custom_call.1} parent=31 // pred_check_branch
          %256 = sbr.rel (%p254) target = $region36
        $region35: #{tpu_custom_call.1} parent=31 // pred_region
          %257 = dma.done %s250, 512
        $region36: #{tpu_custom_call.1} parent=31 // pred_fallthru
          _
        // Predicated region
        $region37: #{tpu_custom_call.1} parent=31 // pred_check
          %p258 = pneg %p87
        $region38: #{tpu_custom_call.1} parent=31 // pred_check_branch
          %260 = sbr.rel (%p258) target = $region40
        $region39: #{tpu_custom_call.1} parent=31 // pred_region
          %261 = dma.done [#allocation6], 512
        $region40: #{tpu_custom_call.1} parent=31 // pred_fallthru
          _
        // Predicated region
        $region41: #{tpu_custom_call.1} parent=31 // pred_check
          %p262 = pneg %p113
        $region42: #{tpu_custom_call.1} parent=31 // pred_check_branch
          %264 = sbr.rel (%p262) target = $region44
        $region43: #{tpu_custom_call.1} parent=31 // pred_region
          %265 = dma.done [#allocation6], 512
        $region44: #{tpu_custom_call.1} parent=31 // pred_fallthru
          _
        %s266 = sand.u32 %s48, 1
        %s267 = scalar_lea.sflag [#allocation3], %s266
        %s268 = sand.u32 %s48, 1
        %s269 = smul.addr %s268, 32
        %s270 = scalar_lea.vmem [#allocation2], %s269
        %p271 = pneg %p61
        %p272 = pneg %p58
        %p273 = pneg %p87
        %p274 = pneg %p84
        %p275 = pneg %p113
        %p276 = pneg %p110
        %p277 = pneg %p141
        %p278 = pneg %p138
        %s279 = sand.u32 %s128, 1
        %s280 = scalar_lea.sflag [#allocation4], %s279
        %s281 = sand.u32 %s128, 1
        %s282 = smul.addr %s281, 32
        %s283 = scalar_lea.vmem [#allocation8], %s282
        %p284 = pneg %p169
        %p285 = pneg %p166
        %s286 = sand.u32 %s156, 1
        %s287 = scalar_lea.sflag [#allocation10], %s286
        %s288 = sand.u32 %s156, 1
        %s289 = smul.addr %s288, 32
        %s290 = scalar_lea.vmem [#allocation9], %s289
        %s291 = smul.u32 4, %s30
        %s292 = smul.u32 4, %s30
        %s293 = smul.u32 4, %s30
        %s294 = smul.u32 4, %s30
        %s295 = smul.u32 4, %s30
        %v296 = vld [vmem:[%s253] sm:$0xff]
        %v297 = vld [vmem:[%s253 + $0x8] sm:$0xff]
        %v298 = vld [vmem:[%s253 + $0x10] sm:$0xff]
        %v299 = vld [vmem:[%s253 + $0x18] sm:$0xff]
        %v300 = vld [vmem:[#allocation5] sm:$0xff]
        %v301 = vld [vmem:[#allocation5 + $0x8] sm:$0xff]
        %v302 = vld [vmem:[#allocation5 + $0x10] sm:$0xff]
        %v303 = vld [vmem:[#allocation5 + $0x18] sm:$0xff]
        %v304 = vld [vmem:[#allocation7] sm:$0xff]
        %v305 = vld [vmem:[#allocation7 + $0x8] sm:$0xff]
        %v306 = vld [vmem:[#allocation7 + $0x10] sm:$0xff]
        %v307 = vld [vmem:[#allocation7 + $0x18] sm:$0xff]
        %vm308 = vcmask 261120
        %v310 = vsel %vm308, %v296, 0
        %v313 = vsel %vm308, %v300, 0
        %315 = vmatprep.subr.mxu0 0.0
        %316 = vmatpush1.xpose.msra.mxu0 %v313
        %317 = vmatprep.subr.mxu0 0.0
        %318 = vmatpush1.xpose.msra.mxu0 0.0
        %319 = vmatprep.subr.mxu0 0.0
        %320 = vmatpush1.xpose.msra.mxu0 0.0
        %321 = vmatprep.subr.mxu0 0.0
        %322 = vmatpush1.xpose.msra.mxu0 0.0
        %323 = vmatprep.subr.mxu0 0.0
        %324 = vmatpush1.xpose.msra.mxu0 0.0
        %325 = vmatprep.subr.mxu0 0.0
        %326 = vmatpush1.xpose.msra.mxu0 0.0
        %327 = vmatprep.subr.mxu0 0.0
        %328 = vmatpush1.xpose.msra.mxu0 0.0
        %329 = vmatprep.subr.mxu0 0.0
        %330 = vmatpush1.xpose.msra.mxu0 0.0
        %331 = vmatprep.subr.mxu0 0.0
        %332 = vmatpush1.xpose.msra.mxu0 0.0
        %333 = vmatprep.subr.mxu0 0.0
        %334 = vmatpush1.xpose.msra.mxu0 0.0
        %335 = vmatprep.subr.mxu0 0.0
        %336 = vmatpush1.xpose.msra.mxu0 0.0
        %337 = vmatprep.subr.mxu0 0.0
        %338 = vmatpush1.xpose.msra.mxu0 0.0
        %339 = vmatprep.subr.mxu0 0.0
        %340 = vmatpush1.xpose.msra.mxu0 0.0
        %341 = vmatprep.subr.mxu0 0.0
        %342 = vmatpush1.xpose.msra.mxu0 0.0
        %343 = vmatprep.subr.mxu0 0.0
        %344 = vmatpush1.xpose.msra.mxu0 0.0
        %345 = vmatprep.subr.mxu0 0.0
        %346 = vmatpush1.xpose.msra.mxu0 0.0
        %347 = vmatprep.subr.mxu0 0.0
        %348 = vmatpush1.xpose.msra.mxu0 0.0
        %349 = vmatprep.subr.mxu0 0.0
        %350 = vmatpush1.xpose.msra.mxu0 0.0
        %351 = vmatprep.subr.mxu0 0.0
        %352 = vmatpush1.xpose.msra.mxu0 0.0
        %353 = vmatprep.subr.mxu0 0.0
        %354 = vmatpush1.xpose.msra.mxu0 0.0
        %355 = vmatprep.subr.mxu0 0.0
        %356 = vmatpush1.xpose.msra.mxu0 0.0
        %357 = vmatprep.subr.mxu0 0.0
        %358 = vmatpush1.xpose.msra.mxu0 0.0
        %359 = vmatprep.subr.mxu0 0.0
        %360 = vmatpush1.xpose.msra.mxu0 0.0
        %361 = vmatprep.subr.mxu0 0.0
        %362 = vmatpush1.xpose.msra.mxu0 0.0
        %363 = vmatprep.subr.mxu0 0.0
        %364 = vmatpush1.xpose.msra.mxu0 0.0
        %365 = vmatprep.subr.mxu0 0.0
        %366 = vmatpush1.xpose.msra.mxu0 0.0
        %367 = vmatprep.subr.mxu0 0.0
        %368 = vmatpush1.xpose.msra.mxu0 0.0
        %369 = vmatprep.subr.mxu0 0.0
        %370 = vmatpush1.xpose.msra.mxu0 0.0
        %371 = vmatprep.subr.mxu0 0.0
        %372 = vmatpush1.xpose.msra.mxu0 0.0
        %373 = vmatprep.subr.mxu0 0.0
        %374 = vmatpush1.xpose.msra.mxu0 0.0
        %375 = vmatprep.subr.mxu0 0.0
        %376 = vmatpush1.xpose.msra.mxu0 0.0
        %377 = vmatprep.subr.mxu0 0.0
        %378 = vmatpush1.xpose.msra.mxu0 0.0
        %379 = vmatprep.mubr.f32.mxu0 0.0
        %380 = vmatmul.mubr.f32.gmra.mrb[0].mxu0 %v310
        %v381 = vpop.f32.mrb[0].mxu0
        %v382 = vadd.f32 0.0, %v381
        %v383 = vpop.f32.mrb[0].mxu0
        %384 = vdwg.mxu0
        %v386 = vsel %vm308, %v297, 0
        %v389 = vsel %vm308, %v301, 0
        %391 = vmatprep.subr.mxu0 0.0
        %392 = vmatpush1.xpose.msra.mxu0 %v389
        %393 = vmatprep.subr.mxu0 0.0
        %394 = vmatpush1.xpose.msra.mxu0 0.0
        %395 = vmatprep.subr.mxu0 0.0
        %396 = vmatpush1.xpose.msra.mxu0 0.0
        %397 = vmatprep.subr.mxu0 0.0
        %398 = vmatpush1.xpose.msra.mxu0 0.0
        %399 = vmatprep.subr.mxu0 0.0
        %400 = vmatpush1.xpose.msra.mxu0 0.0
        %401 = vmatprep.subr.mxu0 0.0
        %402 = vmatpush1.xpose.msra.mxu0 0.0
        %403 = vmatprep.subr.mxu0 0.0
        %404 = vmatpush1.xpose.msra.mxu0 0.0
        %405 = vmatprep.subr.mxu0 0.0
        %406 = vmatpush1.xpose.msra.mxu0 0.0
        %407 = vmatprep.subr.mxu0 0.0
        %408 = vmatpush1.xpose.msra.mxu0 0.0
        %409 = vmatprep.subr.mxu0 0.0
        %410 = vmatpush1.xpose.msra.mxu0 0.0
        %411 = vmatprep.subr.mxu0 0.0
        %412 = vmatpush1.xpose.msra.mxu0 0.0
        %413 = vmatprep.subr.mxu0 0.0
        %414 = vmatpush1.xpose.msra.mxu0 0.0
        %415 = vmatprep.subr.mxu0 0.0
        %416 = vmatpush1.xpose.msra.mxu0 0.0
        %417 = vmatprep.subr.mxu0 0.0
        %418 = vmatpush1.xpose.msra.mxu0 0.0
        %419 = vmatprep.subr.mxu0 0.0
        %420 = vmatpush1.xpose.msra.mxu0 0.0
        %421 = vmatprep.subr.mxu0 0.0
        %422 = vmatpush1.xpose.msra.mxu0 0.0
        %423 = vmatprep.subr.mxu0 0.0
        %424 = vmatpush1.xpose.msra.mxu0 0.0
        %425 = vmatprep.subr.mxu0 0.0
        %426 = vmatpush1.xpose.msra.mxu0 0.0
        %427 = vmatprep.subr.mxu0 0.0
        %428 = vmatpush1.xpose.msra.mxu0 0.0
        %429 = vmatprep.subr.mxu0 0.0
        %430 = vmatpush1.xpose.msra.mxu0 0.0
        %431 = vmatprep.subr.mxu0 0.0
        %432 = vmatpush1.xpose.msra.mxu0 0.0
        %433 = vmatprep.subr.mxu0 0.0
        %434 = vmatpush1.xpose.msra.mxu0 0.0
        %435 = vmatprep.subr.mxu0 0.0
        %436 = vmatpush1.xpose.msra.mxu0 0.0
        %437 = vmatprep.subr.mxu0 0.0
        %438 = vmatpush1.xpose.msra.mxu0 0.0
        %439 = vmatprep.subr.mxu0 0.0
        %440 = vmatpush1.xpose.msra.mxu0 0.0
        %441 = vmatprep.subr.mxu0 0.0
        %442 = vmatpush1.xpose.msra.mxu0 0.0
        %443 = vmatprep.subr.mxu0 0.0
        %444 = vmatpush1.xpose.msra.mxu0 0.0
        %445 = vmatprep.subr.mxu0 0.0
        %446 = vmatpush1.xpose.msra.mxu0 0.0
        %447 = vmatprep.subr.mxu0 0.0
        %448 = vmatpush1.xpose.msra.mxu0 0.0
        %449 = vmatprep.subr.mxu0 0.0
        %450 = vmatpush1.xpose.msra.mxu0 0.0
        %451 = vmatprep.subr.mxu0 0.0
        %452 = vmatpush1.xpose.msra.mxu0 0.0
        %453 = vmatprep.subr.mxu0 0.0
        %454 = vmatpush1.xpose.msra.mxu0 0.0
        %455 = vmatprep.mubr.f32.mxu0 0.0
        %456 = vmatmul.mubr.f32.gmra.mrb[0].mxu0 %v386
        %v457 = vpop.f32.mrb[0].mxu0
        %v458 = vadd.f32 0.0, %v457
        %v459 = vpop.f32.mrb[0].mxu0
        %460 = vdwg.mxu0
        %v462 = vsel %vm308, %v298, 0
        %v465 = vsel %vm308, %v302, 0
        %467 = vmatprep.subr.mxu0 0.0
        %468 = vmatpush1.xpose.msra.mxu0 %v465
        %469 = vmatprep.subr.mxu0 0.0
        %470 = vmatpush1.xpose.msra.mxu0 0.0
        %471 = vmatprep.subr.mxu0 0.0
        %472 = vmatpush1.xpose.msra.mxu0 0.0
        %473 = vmatprep.subr.mxu0 0.0
        %474 = vmatpush1.xpose.msra.mxu0 0.0
        %475 = vmatprep.subr.mxu0 0.0
        %476 = vmatpush1.xpose.msra.mxu0 0.0
        %477 = vmatprep.subr.mxu0 0.0
        %478 = vmatpush1.xpose.msra.mxu0 0.0
        %479 = vmatprep.subr.mxu0 0.0
        %480 = vmatpush1.xpose.msra.mxu0 0.0
        %481 = vmatprep.subr.mxu0 0.0
        %482 = vmatpush1.xpose.msra.mxu0 0.0
        %483 = vmatprep.subr.mxu0 0.0
        %484 = vmatpush1.xpose.msra.mxu0 0.0
        %485 = vmatprep.subr.mxu0 0.0
        %486 = vmatpush1.xpose.msra.mxu0 0.0
        %487 = vmatprep.subr.mxu0 0.0
        %488 = vmatpush1.xpose.msra.mxu0 0.0
        %489 = vmatprep.subr.mxu0 0.0
        %490 = vmatpush1.xpose.msra.mxu0 0.0
        %491 = vmatprep.subr.mxu0 0.0
        %492 = vmatpush1.xpose.msra.mxu0 0.0
        %493 = vmatprep.subr.mxu0 0.0
        %494 = vmatpush1.xpose.msra.mxu0 0.0
        %495 = vmatprep.subr.mxu0 0.0
        %496 = vmatpush1.xpose.msra.mxu0 0.0
        %497 = vmatprep.subr.mxu0 0.0
        %498 = vmatpush1.xpose.msra.mxu0 0.0
        %499 = vmatprep.subr.mxu0 0.0
        %500 = vmatpush1.xpose.msra.mxu0 0.0
        %501 = vmatprep.subr.mxu0 0.0
        %502 = vmatpush1.xpose.msra.mxu0 0.0
        %503 = vmatprep.subr.mxu0 0.0
        %504 = vmatpush1.xpose.msra.mxu0 0.0
        %505 = vmatprep.subr.mxu0 0.0
        %506 = vmatpush1.xpose.msra.mxu0 0.0
        %507 = vmatprep.subr.mxu0 0.0
        %508 = vmatpush1.xpose.msra.mxu0 0.0
        %509 = vmatprep.subr.mxu0 0.0
        %510 = vmatpush1.xpose.msra.mxu0 0.0
        %511 = vmatprep.subr.mxu0 0.0
        %512 = vmatpush1.xpose.msra.mxu0 0.0
        %513 = vmatprep.subr.mxu0 0.0
        %514 = vmatpush1.xpose.msra.mxu0 0.0
        %515 = vmatprep.subr.mxu0 0.0
        %516 = vmatpush1.xpose.msra.mxu0 0.0
        %517 = vmatprep.subr.mxu0 0.0
        %518 = vmatpush1.xpose.msra.mxu0 0.0
        %519 = vmatprep.subr.mxu0 0.0
        %520 = vmatpush1.xpose.msra.mxu0 0.0
        %521 = vmatprep.subr.mxu0 0.0
        %522 = vmatpush1.xpose.msra.mxu0 0.0
        %523 = vmatprep.subr.mxu0 0.0
        %524 = vmatpush1.xpose.msra.mxu0 0.0
        %525 = vmatprep.subr.mxu0 0.0
        %526 = vmatpush1.xpose.msra.mxu0 0.0
        %527 = vmatprep.subr.mxu0 0.0
        %528 = vmatpush1.xpose.msra.mxu0 0.0
        %529 = vmatprep.subr.mxu0 0.0
        %530 = vmatpush1.xpose.msra.mxu0 0.0
        %531 = vmatprep.mubr.f32.mxu0 0.0
        %532 = vmatmul.mubr.f32.gmra.mrb[0].mxu0 %v462
        %v533 = vpop.f32.mrb[0].mxu0
        %v534 = vadd.f32 0.0, %v533
        %v535 = vpop.f32.mrb[0].mxu0
        %536 = vdwg.mxu0
        %v538 = vsel %vm308, %v299, 0
        %v541 = vsel %vm308, %v303, 0
        %543 = vmatprep.subr.mxu0 0.0
        %544 = vmatpush1.xpose.msra.mxu0 %v541
        %545 = vmatprep.subr.mxu0 0.0
        %546 = vmatpush1.xpose.msra.mxu0 0.0
        %547 = vmatprep.subr.mxu0 0.0
        %548 = vmatpush1.xpose.msra.mxu0 0.0
        %549 = vmatprep.subr.mxu0 0.0
        %550 = vmatpush1.xpose.msra.mxu0 0.0
        %551 = vmatprep.subr.mxu0 0.0
        %552 = vmatpush1.xpose.msra.mxu0 0.0
        %553 = vmatprep.subr.mxu0 0.0
        %554 = vmatpush1.xpose.msra.mxu0 0.0
        %555 = vmatprep.subr.mxu0 0.0
        %556 = vmatpush1.xpose.msra.mxu0 0.0
        %557 = vmatprep.subr.mxu0 0.0
        %558 = vmatpush1.xpose.msra.mxu0 0.0
        %559 = vmatprep.subr.mxu0 0.0
        %560 = vmatpush1.xpose.msra.mxu0 0.0
        %561 = vmatprep.subr.mxu0 0.0
        %562 = vmatpush1.xpose.msra.mxu0 0.0
        %563 = vmatprep.subr.mxu0 0.0
        %564 = vmatpush1.xpose.msra.mxu0 0.0
        %565 = vmatprep.subr.mxu0 0.0
        %566 = vmatpush1.xpose.msra.mxu0 0.0
        %567 = vmatprep.subr.mxu0 0.0
        %568 = vmatpush1.xpose.msra.mxu0 0.0
        %569 = vmatprep.subr.mxu0 0.0
        %570 = vmatpush1.xpose.msra.mxu0 0.0
        %571 = vmatprep.subr.mxu0 0.0
        %572 = vmatpush1.xpose.msra.mxu0 0.0
        %573 = vmatprep.subr.mxu0 0.0
        %574 = vmatpush1.xpose.msra.mxu0 0.0
        %575 = vmatprep.subr.mxu0 0.0
        %576 = vmatpush1.xpose.msra.mxu0 0.0
        %577 = vmatprep.subr.mxu0 0.0
        %578 = vmatpush1.xpose.msra.mxu0 0.0
        %579 = vmatprep.subr.mxu0 0.0
        %580 = vmatpush1.xpose.msra.mxu0 0.0
        %581 = vmatprep.subr.mxu0 0.0
        %582 = vmatpush1.xpose.msra.mxu0 0.0
        %583 = vmatprep.subr.mxu0 0.0
        %584 = vmatpush1.xpose.msra.mxu0 0.0
        %585 = vmatprep.subr.mxu0 0.0
        %586 = vmatpush1.xpose.msra.mxu0 0.0
        %587 = vmatprep.subr.mxu0 0.0
        %588 = vmatpush1.xpose.msra.mxu0 0.0
        %589 = vmatprep.subr.mxu0 0.0
        %590 = vmatpush1.xpose.msra.mxu0 0.0
        %591 = vmatprep.subr.mxu0 0.0
        %592 = vmatpush1.xpose.msra.mxu0 0.0
        %593 = vmatprep.subr.mxu0 0.0
        %594 = vmatpush1.xpose.msra.mxu0 0.0
        %595 = vmatprep.subr.mxu0 0.0
        %596 = vmatpush1.xpose.msra.mxu0 0.0
        %597 = vmatprep.subr.mxu0 0.0
        %598 = vmatpush1.xpose.msra.mxu0 0.0
        %599 = vmatprep.subr.mxu0 0.0
        %600 = vmatpush1.xpose.msra.mxu0 0.0
        %601 = vmatprep.subr.mxu0 0.0
        %602 = vmatpush1.xpose.msra.mxu0 0.0
        %603 = vmatprep.subr.mxu0 0.0
        %604 = vmatpush1.xpose.msra.mxu0 0.0
        %605 = vmatprep.subr.mxu0 0.0
        %606 = vmatpush1.xpose.msra.mxu0 0.0
        %607 = vmatprep.mubr.f32.mxu0 0.0
        %608 = vmatmul.mubr.f32.gmra.mrb[0].mxu0 %v538
        %v609 = vpop.f32.mrb[0].mxu0
        %v610 = vadd.f32 0.0, %v609
        %v611 = vpop.f32.mrb[0].mxu0
        %612 = vdwg.mxu0
        %v613 = vmul.f32 %v382, 0.17677669
        %v614 = vmul.f32 %v458, 0.17677669
        %v615 = vmul.f32 %v534, 0.17677669
        %v616 = vmul.f32 %v610, 0.17677669
        %vm617 = vcmask 64512
        %v618 = vsel %vm617, %v613, -inf
        %619 = vmax.xlane.f32.xlu0 %v618
        %v620 = vpop.xlane.xlu0 %619
        %v621 = vsel %vm617, %v614, -inf
        %622 = vmax.xlane.f32.xlu0 %v621
        %v623 = vpop.xlane.xlu0 %622
        %v624 = vsel %vm617, %v615, -inf
        %625 = vmax.xlane.f32.xlu0 %v624
        %v626 = vpop.xlane.xlu0 %625
        %v627 = vsel %vm617, %v616, -inf
        %628 = vmax.xlane.f32.xlu0 %v627
        %v629 = vpop.xlane.xlu0 %628
        %v630 = vsub.f32 %v613, %v620
        %v631 = vsub.f32 %v614, %v623
        %v632 = vsub.f32 %v615, %v626
        %v633 = vsub.f32 %v616, %v629
        %v634 = vmul.f32 %v630, 1.442695
        %v635 = vpow.pop %v634
        %v636 = vmul.f32 %v631, 1.442695
        %v637 = vpow.pop %v636
        %v638 = vmul.f32 %v632, 1.442695
        %v639 = vpow.pop %v638
        %v640 = vmul.f32 %v633, 1.442695
        %v641 = vpow.pop %v640
        %v642 = vsel %vm617, %v635, 0.0
        %643 = vadd.xlane.f32.xlu0 %v642
        %v644 = vpop.xlane.xlu0 %643
        %v645 = vsel %vm617, %v637, 0.0
        %646 = vadd.xlane.f32.xlu0 %v645
        %v647 = vpop.xlane.xlu0 %646
        %v648 = vsel %vm617, %v639, 0.0
        %649 = vadd.xlane.f32.xlu0 %v648
        %v650 = vpop.xlane.xlu0 %649
        %v651 = vsel %vm617, %v641, 0.0
        %652 = vadd.xlane.f32.xlu0 %v651
        %v653 = vpop.xlane.xlu0 %652
        %v654 = vrcp.pop %v644
        %v655 = vrcp.pop %v647
        %v656 = vrcp.pop %v650
        %v657 = vrcp.pop %v653
        %v658 = vmul.f32 %v635, %v654
        %v659 = vmul.f32 %v637, %v655
        %v660 = vmul.f32 %v639, %v656
        %v661 = vmul.f32 %v641, %v657
        %662 = vst.msk [vmem:[%s290] sm:$0xff] %vm617, %v658
        %663 = vst.msk [vmem:[%s290 + $0x8] sm:$0xff] %vm617, %v659
        %664 = vst.msk [vmem:[%s290 + $0x10] sm:$0xff] %vm617, %v660
        %665 = vst.msk [vmem:[%s290 + $0x18] sm:$0xff] %vm617, %v661
        %v667 = vsel %vm617, %v658, 0
        %669 = vmatprep.subr.mxu0 0.0
        %670 = vmatpush1.msra.mxu0 %v304
        %671 = vmatprep.subr.mxu0 0.0
        %672 = vmatpush1.msra.mxu0 0.0
        %673 = vmatprep.subr.mxu0 0.0
        %674 = vmatpush1.msra.mxu0 0.0
        %675 = vmatprep.subr.mxu0 0.0
        %676 = vmatpush1.msra.mxu0 0.0
        %677 = vmatprep.subr.mxu0 0.0
        %678 = vmatpush1.msra.mxu0 0.0
        %679 = vmatprep.subr.mxu0 0.0
        %680 = vmatpush1.msra.mxu0 0.0
        %681 = vmatprep.subr.mxu0 0.0
        %682 = vmatpush1.msra.mxu0 0.0
        %683 = vmatprep.subr.mxu0 0.0
        %684 = vmatpush1.msra.mxu0 0.0
        %685 = vmatprep.subr.mxu0 0.0
        %686 = vmatpush1.msra.mxu0 0.0
        %687 = vmatprep.subr.mxu0 0.0
        %688 = vmatpush1.msra.mxu0 0.0
        %689 = vmatprep.subr.mxu0 0.0
        %690 = vmatpush1.msra.mxu0 0.0
        %691 = vmatprep.subr.mxu0 0.0
        %692 = vmatpush1.msra.mxu0 0.0
        %693 = vmatprep.subr.mxu0 0.0
        %694 = vmatpush1.msra.mxu0 0.0
        %695 = vmatprep.subr.mxu0 0.0
        %696 = vmatpush1.msra.mxu0 0.0
        %697 = vmatprep.subr.mxu0 0.0
        %698 = vmatpush1.msra.mxu0 0.0
        %699 = vmatprep.subr.mxu0 0.0
        %700 = vmatpush1.msra.mxu0 0.0
        %701 = vmatprep.subr.mxu0 0.0
        %702 = vmatpush1.msra.mxu0 0.0
        %703 = vmatprep.subr.mxu0 0.0
        %704 = vmatpush1.msra.mxu0 0.0
        %705 = vmatprep.subr.mxu0 0.0
        %706 = vmatpush1.msra.mxu0 0.0
        %707 = vmatprep.subr.mxu0 0.0
        %708 = vmatpush1.msra.mxu0 0.0
        %709 = vmatprep.subr.mxu0 0.0
        %710 = vmatpush1.msra.mxu0 0.0
        %711 = vmatprep.subr.mxu0 0.0
        %712 = vmatpush1.msra.mxu0 0.0
        %713 = vmatprep.subr.mxu0 0.0
        %714 = vmatpush1.msra.mxu0 0.0
        %715 = vmatprep.subr.mxu0 0.0
        %716 = vmatpush1.msra.mxu0 0.0
        %717 = vmatprep.subr.mxu0 0.0
        %718 = vmatpush1.msra.mxu0 0.0
        %719 = vmatprep.subr.mxu0 0.0
        %720 = vmatpush1.msra.mxu0 0.0
        %721 = vmatprep.subr.mxu0 0.0
        %722 = vmatpush1.msra.mxu0 0.0
        %723 = vmatprep.subr.mxu0 0.0
        %724 = vmatpush1.msra.mxu0 0.0
        %725 = vmatprep.subr.mxu0 0.0
        %726 = vmatpush1.msra.mxu0 0.0
        %727 = vmatprep.subr.mxu0 0.0
        %728 = vmatpush1.msra.mxu0 0.0
        %729 = vmatprep.subr.mxu0 0.0
        %730 = vmatpush1.msra.mxu0 0.0
        %731 = vmatprep.subr.mxu0 0.0
        %732 = vmatpush1.msra.mxu0 0.0
        %733 = vmatprep.mubr.f32.mxu0 0.0
        %734 = vmatmul.mubr.f32.gmra.mrb[0].mxu0 %v667
        %v735 = vpop.f32.mrb[0].mxu0
        %v736 = vadd.f32 0.0, %v735
        %v737 = vpop.f32.mrb[0].mxu0
        %738 = vdwg.mxu0
        %v740 = vsel %vm617, %v659, 0
        %742 = vmatprep.subr.mxu0 0.0
        %743 = vmatpush1.msra.mxu0 %v305
        %744 = vmatprep.subr.mxu0 0.0
        %745 = vmatpush1.msra.mxu0 0.0
        %746 = vmatprep.subr.mxu0 0.0
        %747 = vmatpush1.msra.mxu0 0.0
        %748 = vmatprep.subr.mxu0 0.0
        %749 = vmatpush1.msra.mxu0 0.0
        %750 = vmatprep.subr.mxu0 0.0
        %751 = vmatpush1.msra.mxu0 0.0
        %752 = vmatprep.subr.mxu0 0.0
        %753 = vmatpush1.msra.mxu0 0.0
        %754 = vmatprep.subr.mxu0 0.0
        %755 = vmatpush1.msra.mxu0 0.0
        %756 = vmatprep.subr.mxu0 0.0
        %757 = vmatpush1.msra.mxu0 0.0
        %758 = vmatprep.subr.mxu0 0.0
        %759 = vmatpush1.msra.mxu0 0.0
        %760 = vmatprep.subr.mxu0 0.0
        %761 = vmatpush1.msra.mxu0 0.0
        %762 = vmatprep.subr.mxu0 0.0
        %763 = vmatpush1.msra.mxu0 0.0
        %764 = vmatprep.subr.mxu0 0.0
        %765 = vmatpush1.msra.mxu0 0.0
        %766 = vmatprep.subr.mxu0 0.0
        %767 = vmatpush1.msra.mxu0 0.0
        %768 = vmatprep.subr.mxu0 0.0
        %769 = vmatpush1.msra.mxu0 0.0
        %770 = vmatprep.subr.mxu0 0.0
        %771 = vmatpush1.msra.mxu0 0.0
        %772 = vmatprep.subr.mxu0 0.0
        %773 = vmatpush1.msra.mxu0 0.0
        %774 = vmatprep.subr.mxu0 0.0
        %775 = vmatpush1.msra.mxu0 0.0
        %776 = vmatprep.subr.mxu0 0.0
        %777 = vmatpush1.msra.mxu0 0.0
        %778 = vmatprep.subr.mxu0 0.0
        %779 = vmatpush1.msra.mxu0 0.0
        %780 = vmatprep.subr.mxu0 0.0
        %781 = vmatpush1.msra.mxu0 0.0
        %782 = vmatprep.subr.mxu0 0.0
        %783 = vmatpush1.msra.mxu0 0.0
        %784 = vmatprep.subr.mxu0 0.0
        %785 = vmatpush1.msra.mxu0 0.0
        %786 = vmatprep.subr.mxu0 0.0
        %787 = vmatpush1.msra.mxu0 0.0
        %788 = vmatprep.subr.mxu0 0.0
        %789 = vmatpush1.msra.mxu0 0.0
        %790 = vmatprep.subr.mxu0 0.0
        %791 = vmatpush1.msra.mxu0 0.0
        %792 = vmatprep.subr.mxu0 0.0
        %793 = vmatpush1.msra.mxu0 0.0
        %794 = vmatprep.subr.mxu0 0.0
        %795 = vmatpush1.msra.mxu0 0.0
        %796 = vmatprep.subr.mxu0 0.0
        %797 = vmatpush1.msra.mxu0 0.0
        %798 = vmatprep.subr.mxu0 0.0
        %799 = vmatpush1.msra.mxu0 0.0
        %800 = vmatprep.subr.mxu0 0.0
        %801 = vmatpush1.msra.mxu0 0.0
        %802 = vmatprep.subr.mxu0 0.0
        %803 = vmatpush1.msra.mxu0 0.0
        %804 = vmatprep.subr.mxu0 0.0
        %805 = vmatpush1.msra.mxu0 0.0
        %806 = vmatprep.mubr.f32.mxu0 0.0
        %807 = vmatmul.mubr.f32.gmra.mrb[0].mxu0 %v740
        %v808 = vpop.f32.mrb[0].mxu0
        %v809 = vadd.f32 0.0, %v808
        %v810 = vpop.f32.mrb[0].mxu0
        %811 = vdwg.mxu0
        %v813 = vsel %vm617, %v660, 0
        %815 = vmatprep.subr.mxu0 0.0
        %816 = vmatpush1.msra.mxu0 %v306
        %817 = vmatprep.subr.mxu0 0.0
        %818 = vmatpush1.msra.mxu0 0.0
        %819 = vmatprep.subr.mxu0 0.0
        %820 = vmatpush1.msra.mxu0 0.0
        %821 = vmatprep.subr.mxu0 0.0
        %822 = vmatpush1.msra.mxu0 0.0
        %823 = vmatprep.subr.mxu0 0.0
        %824 = vmatpush1.msra.mxu0 0.0
        %825 = vmatprep.subr.mxu0 0.0
        %826 = vmatpush1.msra.mxu0 0.0
        %827 = vmatprep.subr.mxu0 0.0
        %828 = vmatpush1.msra.mxu0 0.0
        %829 = vmatprep.subr.mxu0 0.0
        %830 = vmatpush1.msra.mxu0 0.0
        %831 = vmatprep.subr.mxu0 0.0
        %832 = vmatpush1.msra.mxu0 0.0
        %833 = vmatprep.subr.mxu0 0.0
        %834 = vmatpush1.msra.mxu0 0.0
        %835 = vmatprep.subr.mxu0 0.0
        %836 = vmatpush1.msra.mxu0 0.0
        %837 = vmatprep.subr.mxu0 0.0
        %838 = vmatpush1.msra.mxu0 0.0
        %839 = vmatprep.subr.mxu0 0.0
        %840 = vmatpush1.msra.mxu0 0.0
        %841 = vmatprep.subr.mxu0 0.0
        %842 = vmatpush1.msra.mxu0 0.0
        %843 = vmatprep.subr.mxu0 0.0
        %844 = vmatpush1.msra.mxu0 0.0
        %845 = vmatprep.subr.mxu0 0.0
        %846 = vmatpush1.msra.mxu0 0.0
        %847 = vmatprep.subr.mxu0 0.0
        %848 = vmatpush1.msra.mxu0 0.0
        %849 = vmatprep.subr.mxu0 0.0
        %850 = vmatpush1.msra.mxu0 0.0
        %851 = vmatprep.subr.mxu0 0.0
        %852 = vmatpush1.msra.mxu0 0.0
        %853 = vmatprep.subr.mxu0 0.0
        %854 = vmatpush1.msra.mxu0 0.0
        %855 = vmatprep.subr.mxu0 0.0
        %856 = vmatpush1.msra.mxu0 0.0
        %857 = vmatprep.subr.mxu0 0.0
        %858 = vmatpush1.msra.mxu0 0.0
        %859 = vmatprep.subr.mxu0 0.0
        %860 = vmatpush1.msra.mxu0 0.0
        %861 = vmatprep.subr.mxu0 0.0
        %862 = vmatpush1.msra.mxu0 0.0
        %863 = vmatprep.subr.mxu0 0.0
        %864 = vmatpush1.msra.mxu0 0.0
        %865 = vmatprep.subr.mxu0 0.0
        %866 = vmatpush1.msra.mxu0 0.0
        %867 = vmatprep.subr.mxu0 0.0
        %868 = vmatpush1.msra.mxu0 0.0
        %869 = vmatprep.subr.mxu0 0.0
        %870 = vmatpush1.msra.mxu0 0.0
        %871 = vmatprep.subr.mxu0 0.0
        %872 = vmatpush1.msra.mxu0 0.0
        %873 = vmatprep.subr.mxu0 0.0
        %874 = vmatpush1.msra.mxu0 0.0
        %875 = vmatprep.subr.mxu0 0.0
        %876 = vmatpush1.msra.mxu0 0.0
        %877 = vmatprep.subr.mxu0 0.0
        %878 = vmatpush1.msra.mxu0 0.0
        %879 = vmatprep.mubr.f32.mxu0 0.0
        %880 = vmatmul.mubr.f32.gmra.mrb[0].mxu0 %v813
        %v881 = vpop.f32.mrb[0].mxu0
        %v882 = vadd.f32 0.0, %v881
        %v883 = vpop.f32.mrb[0].mxu0
        %884 = vdwg.mxu0
        %v886 = vsel %vm617, %v661, 0
        %888 = vmatprep.subr.mxu0 0.0
        %889 = vmatpush1.msra.mxu0 %v307
        %890 = vmatprep.subr.mxu0 0.0
        %891 = vmatpush1.msra.mxu0 0.0
        %892 = vmatprep.subr.mxu0 0.0
        %893 = vmatpush1.msra.mxu0 0.0
        %894 = vmatprep.subr.mxu0 0.0
        %895 = vmatpush1.msra.mxu0 0.0
        %896 = vmatprep.subr.mxu0 0.0
        %897 = vmatpush1.msra.mxu0 0.0
        %898 = vmatprep.subr.mxu0 0.0
        %899 = vmatpush1.msra.mxu0 0.0
        %900 = vmatprep.subr.mxu0 0.0
        %901 = vmatpush1.msra.mxu0 0.0
        %902 = vmatprep.subr.mxu0 0.0
        %903 = vmatpush1.msra.mxu0 0.0
        %904 = vmatprep.subr.mxu0 0.0
        %905 = vmatpush1.msra.mxu0 0.0
        %906 = vmatprep.subr.mxu0 0.0
        %907 = vmatpush1.msra.mxu0 0.0
        %908 = vmatprep.subr.mxu0 0.0
        %909 = vmatpush1.msra.mxu0 0.0
        %910 = vmatprep.subr.mxu0 0.0
        %911 = vmatpush1.msra.mxu0 0.0
        %912 = vmatprep.subr.mxu0 0.0
        %913 = vmatpush1.msra.mxu0 0.0
        %914 = vmatprep.subr.mxu0 0.0
        %915 = vmatpush1.msra.mxu0 0.0
        %916 = vmatprep.subr.mxu0 0.0
        %917 = vmatpush1.msra.mxu0 0.0
        %918 = vmatprep.subr.mxu0 0.0
        %919 = vmatpush1.msra.mxu0 0.0
        %920 = vmatprep.subr.mxu0 0.0
        %921 = vmatpush1.msra.mxu0 0.0
        %922 = vmatprep.subr.mxu0 0.0
        %923 = vmatpush1.msra.mxu0 0.0
        %924 = vmatprep.subr.mxu0 0.0
        %925 = vmatpush1.msra.mxu0 0.0
        %926 = vmatprep.subr.mxu0 0.0
        %927 = vmatpush1.msra.mxu0 0.0
        %928 = vmatprep.subr.mxu0 0.0
        %929 = vmatpush1.msra.mxu0 0.0
        %930 = vmatprep.subr.mxu0 0.0
        %931 = vmatpush1.msra.mxu0 0.0
        %932 = vmatprep.subr.mxu0 0.0
        %933 = vmatpush1.msra.mxu0 0.0
        %934 = vmatprep.subr.mxu0 0.0
        %935 = vmatpush1.msra.mxu0 0.0
        %936 = vmatprep.subr.mxu0 0.0
        %937 = vmatpush1.msra.mxu0 0.0
        %938 = vmatprep.subr.mxu0 0.0
        %939 = vmatpush1.msra.mxu0 0.0
        %940 = vmatprep.subr.mxu0 0.0
        %941 = vmatpush1.msra.mxu0 0.0
        %942 = vmatprep.subr.mxu0 0.0
        %943 = vmatpush1.msra.mxu0 0.0
        %944 = vmatprep.subr.mxu0 0.0
        %945 = vmatpush1.msra.mxu0 0.0
        %946 = vmatprep.subr.mxu0 0.0
        %947 = vmatpush1.msra.mxu0 0.0
        %948 = vmatprep.subr.mxu0 0.0
        %949 = vmatpush1.msra.mxu0 0.0
        %950 = vmatprep.subr.mxu0 0.0
        %951 = vmatpush1.msra.mxu0 0.0
        %952 = vmatprep.mubr.f32.mxu0 0.0
        %953 = vmatmul.mubr.f32.gmra.mrb[0].mxu0 %v886
        %v954 = vpop.f32.mrb[0].mxu0
        %v955 = vadd.f32 0.0, %v954
        %v956 = vpop.f32.mrb[0].mxu0
        %957 = vdwg.mxu0
        %958 = vst.msk [vmem:[%s283] sm:$0xff] %vm308, %v736
        %959 = vst.msk [vmem:[%s283 + $0x8] sm:$0xff] %vm308, %v809
        %960 = vst.msk [vmem:[%s283 + $0x10] sm:$0xff] %vm308, %v882
        %961 = vst.msk [vmem:[%s283 + $0x18] sm:$0xff] %vm308, %v955
        %s962 = sand.u32 %s128, 1
        %s963 = scalar_lea.sflag [#allocation4], %s962
        %s964 = sand.u32 %s128, 1
        %s965 = smul.addr %s964, 32
        %s966 = scalar_lea.vmem [#allocation8], %s965
        %s967 = sand.u32 %s156, 1
        %s968 = scalar_lea.sflag [#allocation10], %s967
        %s969 = sand.u32 %s156, 1
        %s970 = smul.addr %s969, 32
        %s971 = scalar_lea.vmem [#allocation9], %s970
        // Predicated region
        $region45: #{tpu_custom_call.1} parent=31 // pred_check
          %p972 = pneg %p138
        $region46: #{tpu_custom_call.1} parent=31 // pred_check_branch
          %974 = sbr.rel (%p972) target = $region48
        $region47: #{tpu_custom_call.1} parent=31 // pred_region
          %s975 = smul.u32 4, %s30
          %s977 = ssub.s32 512, 512
          %978 = vsyncadd %s963, %s977
          %s979 = sadd.s32 %s31, %s975
          %s980 = smul.addr %s979, 128
          %s981 = scalar_lea.hbm %s3, %s980
          %s982 = sshll.u32 %s966, 4
          %s983 = int_to_ptr.vmem [resolvable:$true] %s982
          %988 = dma.vmem_to_hbm [thread:$0]  %s983, 512, %s981, %s963, 128, 128, 8
        $region48: #{tpu_custom_call.1} parent=31 // pred_fallthru
          _
        // Predicated region
        $region49: #{tpu_custom_call.1} parent=31 // pred_check
          %p989 = pneg %p166
        $region50: #{tpu_custom_call.1} parent=31 // pred_check_branch
          %991 = sbr.rel (%p989) target = $region52
        $region51: #{tpu_custom_call.1} parent=31 // pred_region
          %s992 = smul.u32 4, %s30
          %s994 = ssub.s32 512, 512
          %995 = vsyncadd %s968, %s994
          %s996 = sadd.s32 %s31, %s992
          %s997 = smul.addr %s996, 128
          %s998 = scalar_lea.hbm %s4, %s997
          %s999 = sshll.u32 %s971, 4
          %s1000 = int_to_ptr.vmem [resolvable:$true] %s999
          %1005 = dma.vmem_to_hbm [thread:$0]  %s1000, 512, %s998, %s968, 128, 128, 8
        $region52: #{tpu_custom_call.1} parent=31 // pred_fallthru
          _
      $region32: #{tpu_custom_call.1} parent=5 // pred_fallthru
        _
      %p1006 = scmp.le.s32.totalorder 2, %s21
      // Predicated region
      $region53: #{tpu_custom_call.1} parent=5 // pred_check
        %p1007 = pneg %p1006
      $region54: #{tpu_custom_call.1} parent=5 // pred_check_branch
        %1009 = sbr.rel (%p1007) target = $region56
      $region55: #{tpu_custom_call.1} parent=5 // pred_region
        %s1010 = ssub.s32 %s21, 2
        // Predicated region
        $region57: #{tpu_custom_call.1} parent=55 // pred_check
          %p1011 = pneg %p144
        $region58: #{tpu_custom_call.1} parent=55 // pred_check_branch
          %1013 = sbr.rel (%p1011) target = $region60
        $region59: #{tpu_custom_call.1} parent=55 // pred_region
          %s1014 = sand.u32 %s129, 1
          %s1015 = scalar_lea.sflag [#allocation4], %s1014
          %s1016 = sand.u32 %s129, 1
          %s1017 = smul.addr %s1016, 32
          %s1018 = scalar_lea.vmem [#allocation8], %s1017
          %1019 = dma.done %s1015, 512
        $region60: #{tpu_custom_call.1} parent=55 // pred_fallthru
          _
        // Predicated region
        $region61: #{tpu_custom_call.1} parent=55 // pred_check
          %p1020 = pneg %p172
        $region62: #{tpu_custom_call.1} parent=55 // pred_check_branch
          %1022 = sbr.rel (%p1020) target = $region64
        $region63: #{tpu_custom_call.1} parent=55 // pred_region
          %s1023 = sand.u32 %s157, 1
          %s1024 = scalar_lea.sflag [#allocation10], %s1023
          %s1025 = sand.u32 %s157, 1
          %s1026 = smul.addr %s1025, 32
          %s1027 = scalar_lea.vmem [#allocation9], %s1026
          %1028 = dma.done %s1024, 512
        $region64: #{tpu_custom_call.1} parent=55 // pred_fallthru
          _
      $region56: #{tpu_custom_call.1} parent=5 // pred_fallthru
        _
    $region6: #{tpu_custom_call.1} parent=1 // loop_footer
      %s25 = sadd.s32 1, %s21
    $region7: #{tpu_custom_call.1} parent=1 // loop_footer_branch
      %20 = sbr.rel target = $region3
    $region8: #{tpu_custom_call.1} parent=1 // loop_exit
      _
    %1029 = vsyncpa [#allocation3], 1
    %s1030 = scalar_lea.sflag [#allocation3], 1
    %1031 = vsyncpa %s1030, 1
    %1032 = vsyncpa [#allocation6], 1
    %1033 = vsyncpa [#allocation4], 1
    %s1034 = scalar_lea.sflag [#allocation4], 1
    %1035 = vsyncpa %s1034, 1
    %1036 = vsyncpa [#allocation10], 1
    %s1037 = scalar_lea.sflag [#allocation10], 1
    %1038 = vsyncpa %s1037, 1

// kernel: tpu_custom_call.1
$region0: #{tpu_custom_call.1}
  #allocation0 [shape = 'u32[]', space=smem, size = 0x4, offset = 0x4, fixed_abs, tag = 'smem constant byte address 0x4 - core index']
  #allocation1 [shape = 'u32[144,128]{1,0:T(1,128)}', space=vmem, size = 0x12000, scoped, tag = 'internal scratch']
  %s0 = inlined_call_operand.hbm [shape: f32[8,8,32], index: 0, kind: input, shape index: {}]
  %s1 = inlined_call_operand.hbm [shape: f32[8,8,32], index: 1, kind: input, shape index: {}]
  %s2 = inlined_call_operand.hbm [shape: f32[8,8,32], index: 2, kind: input, shape index: {}]
  %s3 = inlined_call_operand.hbm [shape: f32[8,8,32], index: 3, kind: output, shape index: {0}]
  %s4 = inlined_call_operand.hbm [shape: f32[8,8,8], index: 4, kind: output, shape index: {1}]
  %5 = xla_tuple %s3, %s4
  %s6 = sld [smem:[#allocation0]]
  $region65: #{tpu_custom_call.1} parent=0
    _
  %s8 = ssub.s32 1, %s6
  %s9 = scalar_select 0, %s8, %s6
  $region1: #{tpu_custom_call.1} parent=0
    #allocation2 [shape = 'u8[32768]{0}', space=vmem, size = 0x8000, scoped, tag = 'input window, operand 0']
    #allocation3 [shape = 's32[2]{0}', space=sflag, size = 0x8, scoped, tag = 'scoped memory for tpu_custom_call.1']
    #allocation4 [shape = 's32[2]{0}', space=sflag, size = 0x8, scoped, tag = 'scoped memory for tpu_custom_call.1']
    #allocation5 [shape = 'u8[32768]{0}', space=vmem, size = 0x8000, scoped, tag = 'input window, operand 1']
    #allocation6 [shape = 's32[2]{0}', space=sflag, size = 0x8, scoped, tag = 'scoped memory for tpu_custom_call.1']
    #allocation7 [shape = 'u8[32768]{0}', space=vmem, size = 0x8000, scoped, tag = 'input window, operand 2']
    #allocation8 [shape = 'u8[32768]{0}', space=vmem, size = 0x8000, scoped, tag = 'output window, operand 0']
    #allocation9 [shape = 'u8[32768]{0}', space=vmem, size = 0x8000, scoped, tag = 'output window, operand 1']
    #allocation10 [shape = 's32[2]{0}', space=sflag, size = 0x8, scoped, tag = 'scoped memory for tpu_custom_call.1']
    %10 = vsyncpa [#allocation3], 0
    %s11 = scalar_lea.sflag [#allocation3], 1
    %12 = vsyncpa %s11, 0
    %13 = vsyncpa [#allocation6], 0
    %s14 = scalar_lea.sflag [#allocation6], 1
    %15 = vsyncpa %s14, 0
    %16 = vsyncpa [#allocation4], 0
    %s17 = scalar_lea.sflag [#allocation4], 1
    %18 = vsyncpa %s17, 0
    %19 = vsyncpa [#allocation10], 0
    %s20 = scalar_lea.sflag [#allocation10], 1
    %21 = vsyncpa %s20, 0
    loop: start=0, step=1, limit=4
    $region2: #{tpu_custom_call.1} parent=1 // loop_pre_header
      _
    $region3: #{tpu_custom_call.1} parent=1 // loop_header
      %s23 = sphi 0, %s27
      %p24 = scmp.ge.s32.totalorder %s23, 4
      %s30 = sphi 0, %s42
      %s31 = sphi 0, %s38
      %s32 = sphi 0, %s30
      %s33 = sphi 0, %s31
      %s34 = sphi 0, %s32
      %s35 = sphi 0, %s33
      %s47 = sphi 0, %s49
      %s50 = sphi 0, %s47
      %s51 = sphi 0, %s50
      %s67 = sphi 0, %s51
      %s73 = sphi 0, %s75
      %s76 = sphi 0, %s73
      %s77 = sphi 0, %s76
      %s93 = sphi 0, %s77
      %s99 = sphi 0, %s101
      %s102 = sphi 0, %s99
      %s103 = sphi 0, %s102
      %s119 = sphi 0, %s103
      %s127 = sphi 0, %s129
      %s130 = sphi 0, %s127
      %s131 = sphi 0, %s130
      %s147 = sphi 0, %s131
      %s155 = sphi 0, %s157
      %s158 = sphi 0, %s155
      %s159 = sphi 0, %s158
      %s175 = sphi 0, %s159
    $region4: #{tpu_custom_call.1} parent=1 // loop_header_branch
      %26 = sbr.rel (%p24) target = $region8
    $region5: #{tpu_custom_call.1} parent=1 // loop_body
      %s28 = ssub.s32 %s23, 1
      %s29 = ssub.s32 %s23, 2
      %s36 = sadd.s32 1, %s31
      %p37 = scmp.ge.s32.totalorder %s36, 1
      %s38 = scalar_select %p37, 0, %s36
      %s39 = sadd.s32 1, %s30
      %s40 = scalar_select %p37, %s39, %s30
      %p41 = scmp.ge.s32.totalorder %s40, 2
      %s42 = scalar_select %p41, 0, %s40
      %s43 = ssub.s32 %s30, %s42
      %s44 = ssub.s32 %s31, %s38
      %s45 = sor.u32 %s43, %s44
      %p46 = scmp.eq.s32.totalorder %s45, 0
      %s48 = sadd.s32 %s47, 1
      %s49 = scalar_select %p46, %s47, %s48
      %p52 = pneg %p46
      %p53 = scmp.eq.s32.totalorder %s23, 1
      %p54 = por %p52, %p53
      %p55 = scmp.ne.s32.totalorder %s47, %s50
      %p56 = scmp.eq.s32.totalorder %s23, 0
      %p57 = por %p55, %p56
      %p58 = scmp.ne.s32.totalorder %s47, %s50
      %p59 = scmp.eq.s32.totalorder %s28, 1
      %p60 = por %p58, %p59
      %p61 = scmp.ne.s32.totalorder %s50, %s51
      %p62 = scmp.eq.s32.totalorder %s28, 0
      %p63 = por %p61, %p62
      %p64 = scmp.ne.s32.totalorder %s50, %s51
      %p65 = scmp.eq.s32.totalorder %s29, 1
      %p66 = por %p64, %p65
      %p68 = scmp.ne.s32.totalorder %s51, %s67
      %p69 = scmp.eq.s32.totalorder %s29, 0
      %p70 = por %p68, %p69
      %s71 = ssub.s32 %s30, %s42
      %p72 = scmp.eq.s32.totalorder %s71, 0
      %s74 = sadd.s32 %s73, 1
      %s75 = scalar_select %p72, %s73, %s74
      %p78 = pneg %p72
      %p79 = scmp.eq.s32.totalorder %s23, 1
      %p80 = por %p78, %p79
      %p81 = scmp.ne.s32.totalorder %s73, %s76
      %p82 = scmp.eq.s32.totalorder %s23, 0
      %p83 = por %p81, %p82
      %p84 = scmp.ne.s32.totalorder %s73, %s76
      %p85 = scmp.eq.s32.totalorder %s28, 1
      %p86 = por %p84, %p85
      %p87 = scmp.ne.s32.totalorder %s76, %s77
      %p88 = scmp.eq.s32.totalorder %s28, 0
      %p89 = por %p87, %p88
      %p90 = scmp.ne.s32.totalorder %s76, %s77
      %p91 = scmp.eq.s32.totalorder %s29, 1
      %p92 = por %p90, %p91
      %p94 = scmp.ne.s32.totalorder %s77, %s93
      %p95 = scmp.eq.s32.totalorder %s29, 0
      %p96 = por %p94, %p95
      %s97 = ssub.s32 %s30, %s42
      %p98 = scmp.eq.s32.totalorder %s97, 0
      %s100 = sadd.s32 %s99, 1
      %s101 = scalar_select %p98, %s99, %s100
      %p104 = pneg %p98
      %p105 = scmp.eq.s32.totalorder %s23, 1
      %p106 = por %p104, %p105
      %p107 = scmp.ne.s32.totalorder %s99, %s102
      %p108 = scmp.eq.s32.totalorder %s23, 0
      %p109 = por %p107, %p108
      %p110 = scmp.ne.s32.totalorder %s99, %s102
      %p111 = scmp.eq.s32.totalorder %s28, 1
      %p112 = por %p110, %p111
      %p113 = scmp.ne.s32.totalorder %s102, %s103
      %p114 = scmp.eq.s32.totalorder %s28, 0
      %p115 = por %p113, %p114
      %p116 = scmp.ne.s32.totalorder %s102, %s103
      %p117 = scmp.eq.s32.totalorder %s29, 1
      %p118 = por %p116, %p117
      %p120 = scmp.ne.s32.totalorder %s103, %s119
      %p121 = scmp.eq.s32.totalorder %s29, 0
      %p122 = por %p120, %p121
      %s123 = ssub.s32 %s30, %s42
      %s124 = ssub.s32 %s31, %s38
      %s125 = sor.u32 %s123, %s124
      %p126 = scmp.eq.s32.totalorder %s125, 0
      %s128 = sadd.s32 %s127, 1
      %s129 = scalar_select %p126, %s127, %s128
      %p132 = pneg %p126
      %p133 = scmp.eq.s32.totalorder %s23, 1
      %p134 = por %p132, %p133
      %p135 = scmp.ne.s32.totalorder %s127, %s130
      %p136 = scmp.eq.s32.totalorder %s23, 0
      %p137 = por %p135, %p136
      %p138 = scmp.ne.s32.totalorder %s127, %s130
      %p139 = scmp.eq.s32.totalorder %s28, 1
      %p140 = por %p138, %p139
      %p141 = scmp.ne.s32.totalorder %s130, %s131
      %p142 = scmp.eq.s32.totalorder %s28, 0
      %p143 = por %p141, %p142
      %p144 = scmp.ne.s32.totalorder %s130, %s131
      %p145 = scmp.eq.s32.totalorder %s29, 1
      %p146 = por %p144, %p145
      %p148 = scmp.ne.s32.totalorder %s131, %s147
      %p149 = scmp.eq.s32.totalorder %s29, 0
      %p150 = por %p148, %p149
      %s151 = ssub.s32 %s30, %s42
      %s152 = ssub.s32 %s31, %s38
      %s153 = sor.u32 %s151, %s152
      %p154 = scmp.eq.s32.totalorder %s153, 0
      %s156 = sadd.s32 %s155, 1
      %s157 = scalar_select %p154, %s155, %s156
      %p160 = pneg %p154
      %p161 = scmp.eq.s32.totalorder %s23, 1
      %p162 = por %p160, %p161
      %p163 = scmp.ne.s32.totalorder %s155, %s158
      %p164 = scmp.eq.s32.totalorder %s23, 0
      %p165 = por %p163, %p164
      %p166 = scmp.ne.s32.totalorder %s155, %s158
      %p167 = scmp.eq.s32.totalorder %s28, 1
      %p168 = por %p166, %p167
      %p169 = scmp.ne.s32.totalorder %s158, %s159
      %p170 = scmp.eq.s32.totalorder %s28, 0
      %p171 = por %p169, %p170
      %p172 = scmp.ne.s32.totalorder %s158, %s159
      %p173 = scmp.eq.s32.totalorder %s29, 1
      %p174 = por %p172, %p173
      %p176 = scmp.ne.s32.totalorder %s159, %s175
      %p177 = scmp.eq.s32.totalorder %s29, 0
      %p178 = por %p176, %p177
      %p179 = scmp.le.s32.totalorder 1, %s23
      %p180 = scmp.lt.s32.totalorder %s23, 3
      %p181 = pnand %p179, %p180
      %p182 = pneg %p181
      // Predicated region
      $region9: #{tpu_custom_call.1} parent=5 // pred_check
        _
      $region10: #{tpu_custom_call.1} parent=5 // pred_check_branch
        %184 = sbr.rel (%p181) target = $region12
      $region11: #{tpu_custom_call.1} parent=5 // pred_region
        %s185 = ssub.s32 %s23, 1
      $region12: #{tpu_custom_call.1} parent=5 // pred_fallthru
        _
      %p186 = scmp.lt.s32.totalorder %s23, 2
      // Predicated region
      $region13: #{tpu_custom_call.1} parent=5 // pred_check
        %p187 = pneg %p186
      $region14: #{tpu_custom_call.1} parent=5 // pred_check_branch
        %189 = sbr.rel (%p187) target = $region16
      $region15: #{tpu_custom_call.1} parent=5 // pred_region
        // Predicated region
        $region17: #{tpu_custom_call.1} parent=15 // pred_check
          %p190 = pneg %p57
        $region18: #{tpu_custom_call.1} parent=15 // pred_check_branch
          %192 = sbr.rel (%p190) target = $region20
        $region19: #{tpu_custom_call.1} parent=15 // pred_region
          %s193 = sand.u32 %s47, 1
          %s194 = scalar_lea.sflag [#allocation3], %s193
          %s195 = sand.u32 %s47, 1
          %s196 = smul.addr %s195, 32
          %s197 = scalar_lea.vmem [#allocation2], %s196
          %s198 = smul.u32 4, %s30
          %s200 = ssub.s32 512, 512
          %201 = vsyncadd %s194, %s200
          %s202 = sadd.s32 %s31, %s198
          %s203 = smul.addr %s202, 128
          %s204 = scalar_lea.hbm %s0, %s203
          %s205 = sshll.u32 %s197, 4
          %s206 = int_to_ptr.vmem [resolvable:$true] %s205
          %211 = dma.hbm_to_vmem [thread:$0]  %s204, 512, %s206, %s194, 128, 128, 8
        $region20: #{tpu_custom_call.1} parent=15 // pred_fallthru
          _
        // Predicated region
        $region21: #{tpu_custom_call.1} parent=15 // pred_check
          %p212 = pneg %p83
        $region22: #{tpu_custom_call.1} parent=15 // pred_check_branch
          %214 = sbr.rel (%p212) target = $region24
        $region23: #{tpu_custom_call.1} parent=15 // pred_region
          %s215 = sand.u32 %s23, 1
          %s216 = scalar_lea.sflag [#allocation6], %s215
          %s217 = sand.u32 %s73, 1
          %s218 = smul.addr %s217, 32
          %s219 = scalar_lea.vmem [#allocation5], %s218
          %s220 = smul.u32 4, %s30
          %s222 = ssub.s32 512, 512
          %223 = vsyncadd %s216, %s222
          %s224 = smul.addr %s220, 128
          %s225 = scalar_lea.hbm %s1, %s224
          %s226 = sshll.u32 %s219, 4
          %s227 = int_to_ptr.vmem [resolvable:$true] %s226
          %232 = dma.hbm_to_vmem [thread:$0]  %s225, 512, %s227, %s216, 128, 128, 8
        $region24: #{tpu_custom_call.1} parent=15 // pred_fallthru
          _
        // Predicated region
        $region25: #{tpu_custom_call.1} parent=15 // pred_check
          %p233 = pneg %p109
        $region26: #{tpu_custom_call.1} parent=15 // pred_check_branch
          %235 = sbr.rel (%p233) target = $region28
        $region27: #{tpu_custom_call.1} parent=15 // pred_region
          %s236 = sand.u32 %s23, 1
          %s237 = scalar_lea.sflag [#allocation6], %s236
          %s238 = sand.u32 %s99, 1
          %s239 = smul.addr %s238, 32
          %s240 = scalar_lea.vmem [#allocation7], %s239
          %s241 = smul.u32 4, %s30
          %s243 = ssub.s32 512, 512
          %244 = vsyncadd %s237, %s243
          %s245 = smul.addr %s241, 128
          %s246 = scalar_lea.hbm %s2, %s245
          %s247 = sshll.u32 %s240, 4
          %s248 = int_to_ptr.vmem [resolvable:$true] %s247
          %253 = dma.hbm_to_vmem [thread:$0]  %s246, 512, %s248, %s237, 128, 128, 8
        $region28: #{tpu_custom_call.1} parent=15 // pred_fallthru
          _
      $region16: #{tpu_custom_call.1} parent=5 // pred_fallthru
        _
      %p254 = scmp.le.s32.totalorder 1, %s23
      %p255 = scmp.lt.s32.totalorder %s23, 3
      %p256 = pnand %p254, %p255
      %p257 = pneg %p256
      // Predicated region
      $region29: #{tpu_custom_call.1} parent=5 // pred_check
        _
      $region30: #{tpu_custom_call.1} parent=5 // pred_check_branch
        %259 = sbr.rel (%p256) target = $region32
      $region31: #{tpu_custom_call.1} parent=5 // pred_region
        %s260 = ssub.s32 %s23, 1
        %s261 = sand.u32 %s50, 1
        %s262 = scalar_lea.sflag [#allocation3], %s261
        %s263 = sand.u32 %s50, 1
        %s264 = smul.addr %s263, 32
        %s265 = scalar_lea.vmem [#allocation2], %s264
        // Predicated region
        $region33: #{tpu_custom_call.1} parent=31 // pred_check
          %p266 = pneg %p63
        $region34: #{tpu_custom_call.1} parent=31 // pred_check_branch
          %268 = sbr.rel (%p266) target = $region36
        $region35: #{tpu_custom_call.1} parent=31 // pred_region
          %269 = dma.done %s262, 512
        $region36: #{tpu_custom_call.1} parent=31 // pred_fallthru
          _
        %s270 = sand.u32 %s28, 1
        %s271 = scalar_lea.sflag [#allocation6], %s270
        %s272 = sand.u32 %s76, 1
        %s273 = smul.addr %s272, 32
        %s274 = scalar_lea.vmem [#allocation5], %s273
        // Predicated region
        $region37: #{tpu_custom_call.1} parent=31 // pred_check
          %p275 = pneg %p89
        $region38: #{tpu_custom_call.1} parent=31 // pred_check_branch
          %277 = sbr.rel (%p275) target = $region40
        $region39: #{tpu_custom_call.1} parent=31 // pred_region
          %278 = dma.done %s271, 512
        $region40: #{tpu_custom_call.1} parent=31 // pred_fallthru
          _
        %s279 = sand.u32 %s28, 1
        %s280 = scalar_lea.sflag [#allocation6], %s279
        %s281 = sand.u32 %s102, 1
        %s282 = smul.addr %s281, 32
        %s283 = scalar_lea.vmem [#allocation7], %s282
        // Predicated region
        $region41: #{tpu_custom_call.1} parent=31 // pred_check
          %p284 = pneg %p115
        $region42: #{tpu_custom_call.1} parent=31 // pred_check_branch
          %286 = sbr.rel (%p284) target = $region44
        $region43: #{tpu_custom_call.1} parent=31 // pred_region
          %287 = dma.done %s280, 512
        $region44: #{tpu_custom_call.1} parent=31 // pred_fallthru
          _
        %s288 = sand.u32 %s50, 1
        %s289 = scalar_lea.sflag [#allocation3], %s288
        %s290 = sand.u32 %s50, 1
        %s291 = smul.addr %s290, 32
        %s292 = scalar_lea.vmem [#allocation2], %s291
        %p293 = pneg %p63
        %p294 = pneg %p60
        %s295 = sand.u32 %s28, 1
        %s296 = scalar_lea.sflag [#allocation6], %s295
        %s297 = sand.u32 %s76, 1
        %s298 = smul.addr %s297, 32
        %s299 = scalar_lea.vmem [#allocation5], %s298
        %p300 = pneg %p89
        %p301 = pneg %p86
        %s302 = sand.u32 %s28, 1
        %s303 = scalar_lea.sflag [#allocation6], %s302
        %s304 = sand.u32 %s102, 1
        %s305 = smul.addr %s304, 32
        %s306 = scalar_lea.vmem [#allocation7], %s305
        %p307 = pneg %p115
        %p308 = pneg %p112
        %p309 = pneg %p143
        %p310 = pneg %p140
        %s311 = sand.u32 %s130, 1
        %s312 = scalar_lea.sflag [#allocation4], %s311
        %s313 = sand.u32 %s130, 1
        %s314 = smul.addr %s313, 32
        %s315 = scalar_lea.vmem [#allocation8], %s314
        %p316 = pneg %p171
        %p317 = pneg %p168
        %s318 = sand.u32 %s158, 1
        %s319 = scalar_lea.sflag [#allocation10], %s318
        %s320 = sand.u32 %s158, 1
        %s321 = smul.addr %s320, 32
        %s322 = scalar_lea.vmem [#allocation9], %s321
        %s323 = smul.u32 4, %s32
        %s324 = smul.u32 4, %s32
        %s325 = smul.u32 4, %s32
        %s326 = smul.u32 4, %s32
        %s327 = smul.u32 4, %s32
        %v328 = vld [vmem:[%s265] sm:$0xff]
        %v329 = vld [vmem:[%s265 + $0x8] sm:$0xff]
        %v330 = vld [vmem:[%s265 + $0x10] sm:$0xff]
        %v331 = vld [vmem:[%s265 + $0x18] sm:$0xff]
        %v332 = vld [vmem:[%s274] sm:$0xff]
        %v333 = vld [vmem:[%s274 + $0x8] sm:$0xff]
        %v334 = vld [vmem:[%s274 + $0x10] sm:$0xff]
        %v335 = vld [vmem:[%s274 + $0x18] sm:$0xff]
        %v336 = vld [vmem:[%s283] sm:$0xff]
        %v337 = vld [vmem:[%s283 + $0x8] sm:$0xff]
        %v338 = vld [vmem:[%s283 + $0x10] sm:$0xff]
        %v339 = vld [vmem:[%s283 + $0x18] sm:$0xff]
        %vm340 = vcmask 261120
        %v342 = vsel %vm340, %v328, 0
        %v345 = vsel %vm340, %v332, 0
        %347 = vmatprep.subr.mxu0 0.0
        %348 = vmatpush1.xpose.msra.mxu0 %v345
        %349 = vmatprep.subr.mxu0 0.0
        %350 = vmatpush1.xpose.msra.mxu0 0.0
        %351 = vmatprep.subr.mxu0 0.0
        %352 = vmatpush1.xpose.msra.mxu0 0.0
        %353 = vmatprep.subr.mxu0 0.0
        %354 = vmatpush1.xpose.msra.mxu0 0.0
        %355 = vmatprep.subr.mxu0 0.0
        %356 = vmatpush1.xpose.msra.mxu0 0.0
        %357 = vmatprep.subr.mxu0 0.0
        %358 = vmatpush1.xpose.msra.mxu0 0.0
        %359 = vmatprep.subr.mxu0 0.0
        %360 = vmatpush1.xpose.msra.mxu0 0.0
        %361 = vmatprep.subr.mxu0 0.0
        %362 = vmatpush1.xpose.msra.mxu0 0.0
        %363 = vmatprep.subr.mxu0 0.0
        %364 = vmatpush1.xpose.msra.mxu0 0.0
        %365 = vmatprep.subr.mxu0 0.0
        %366 = vmatpush1.xpose.msra.mxu0 0.0
        %367 = vmatprep.subr.mxu0 0.0
        %368 = vmatpush1.xpose.msra.mxu0 0.0
        %369 = vmatprep.subr.mxu0 0.0
        %370 = vmatpush1.xpose.msra.mxu0 0.0
        %371 = vmatprep.subr.mxu0 0.0
        %372 = vmatpush1.xpose.msra.mxu0 0.0
        %373 = vmatprep.subr.mxu0 0.0
        %374 = vmatpush1.xpose.msra.mxu0 0.0
        %375 = vmatprep.subr.mxu0 0.0
        %376 = vmatpush1.xpose.msra.mxu0 0.0
        %377 = vmatprep.subr.mxu0 0.0
        %378 = vmatpush1.xpose.msra.mxu0 0.0
        %379 = vmatprep.subr.mxu0 0.0
        %380 = vmatpush1.xpose.msra.mxu0 0.0
        %381 = vmatprep.subr.mxu0 0.0
        %382 = vmatpush1.xpose.msra.mxu0 0.0
        %383 = vmatprep.subr.mxu0 0.0
        %384 = vmatpush1.xpose.msra.mxu0 0.0
        %385 = vmatprep.subr.mxu0 0.0
        %386 = vmatpush1.xpose.msra.mxu0 0.0
        %387 = vmatprep.subr.mxu0 0.0
        %388 = vmatpush1.xpose.msra.mxu0 0.0
        %389 = vmatprep.subr.mxu0 0.0
        %390 = vmatpush1.xpose.msra.mxu0 0.0
        %391 = vmatprep.subr.mxu0 0.0
        %392 = vmatpush1.xpose.msra.mxu0 0.0
        %393 = vmatprep.subr.mxu0 0.0
        %394 = vmatpush1.xpose.msra.mxu0 0.0
        %395 = vmatprep.subr.mxu0 0.0
        %396 = vmatpush1.xpose.msra.mxu0 0.0
        %397 = vmatprep.subr.mxu0 0.0
        %398 = vmatpush1.xpose.msra.mxu0 0.0
        %399 = vmatprep.subr.mxu0 0.0
        %400 = vmatpush1.xpose.msra.mxu0 0.0
        %401 = vmatprep.subr.mxu0 0.0
        %402 = vmatpush1.xpose.msra.mxu0 0.0
        %403 = vmatprep.subr.mxu0 0.0
        %404 = vmatpush1.xpose.msra.mxu0 0.0
        %405 = vmatprep.subr.mxu0 0.0
        %406 = vmatpush1.xpose.msra.mxu0 0.0
        %407 = vmatprep.subr.mxu0 0.0
        %408 = vmatpush1.xpose.msra.mxu0 0.0
        %409 = vmatprep.subr.mxu0 0.0
        %410 = vmatpush1.xpose.msra.mxu0 0.0
        %411 = vmatprep.mubr.f32.mxu0 0.0
        %412 = vmatmul.mubr.f32.gmra.mrb[0].mxu0 %v342
        %v413 = vpop.f32.mrb[0].mxu0
        %v414 = vadd.f32 0.0, %v413
        %v415 = vpop.f32.mrb[0].mxu0
        %416 = vdwg.mxu0
        %v418 = vsel %vm340, %v329, 0
        %v421 = vsel %vm340, %v333, 0
        %423 = vmatprep.subr.mxu0 0.0
        %424 = vmatpush1.xpose.msra.mxu0 %v421
        %425 = vmatprep.subr.mxu0 0.0
        %426 = vmatpush1.xpose.msra.mxu0 0.0
        %427 = vmatprep.subr.mxu0 0.0
        %428 = vmatpush1.xpose.msra.mxu0 0.0
        %429 = vmatprep.subr.mxu0 0.0
        %430 = vmatpush1.xpose.msra.mxu0 0.0
        %431 = vmatprep.subr.mxu0 0.0
        %432 = vmatpush1.xpose.msra.mxu0 0.0
        %433 = vmatprep.subr.mxu0 0.0
        %434 = vmatpush1.xpose.msra.mxu0 0.0
        %435 = vmatprep.subr.mxu0 0.0
        %436 = vmatpush1.xpose.msra.mxu0 0.0
        %437 = vmatprep.subr.mxu0 0.0
        %438 = vmatpush1.xpose.msra.mxu0 0.0
        %439 = vmatprep.subr.mxu0 0.0
        %440 = vmatpush1.xpose.msra.mxu0 0.0
        %441 = vmatprep.subr.mxu0 0.0
        %442 = vmatpush1.xpose.msra.mxu0 0.0
        %443 = vmatprep.subr.mxu0 0.0
        %444 = vmatpush1.xpose.msra.mxu0 0.0
        %445 = vmatprep.subr.mxu0 0.0
        %446 = vmatpush1.xpose.msra.mxu0 0.0
        %447 = vmatprep.subr.mxu0 0.0
        %448 = vmatpush1.xpose.msra.mxu0 0.0
        %449 = vmatprep.subr.mxu0 0.0
        %450 = vmatpush1.xpose.msra.mxu0 0.0
        %451 = vmatprep.subr.mxu0 0.0
        %452 = vmatpush1.xpose.msra.mxu0 0.0
        %453 = vmatprep.subr.mxu0 0.0
        %454 = vmatpush1.xpose.msra.mxu0 0.0
        %455 = vmatprep.subr.mxu0 0.0
        %456 = vmatpush1.xpose.msra.mxu0 0.0
        %457 = vmatprep.subr.mxu0 0.0
        %458 = vmatpush1.xpose.msra.mxu0 0.0
        %459 = vmatprep.subr.mxu0 0.0
        %460 = vmatpush1.xpose.msra.mxu0 0.0
        %461 = vmatprep.subr.mxu0 0.0
        %462 = vmatpush1.xpose.msra.mxu0 0.0
        %463 = vmatprep.subr.mxu0 0.0
        %464 = vmatpush1.xpose.msra.mxu0 0.0
        %465 = vmatprep.subr.mxu0 0.0
        %466 = vmatpush1.xpose.msra.mxu0 0.0
        %467 = vmatprep.subr.mxu0 0.0
        %468 = vmatpush1.xpose.msra.mxu0 0.0
        %469 = vmatprep.subr.mxu0 0.0
        %470 = vmatpush1.xpose.msra.mxu0 0.0
        %471 = vmatprep.subr.mxu0 0.0
        %472 = vmatpush1.xpose.msra.mxu0 0.0
        %473 = vmatprep.subr.mxu0 0.0
        %474 = vmatpush1.xpose.msra.mxu0 0.0
        %475 = vmatprep.subr.mxu0 0.0
        %476 = vmatpush1.xpose.msra.mxu0 0.0
        %477 = vmatprep.subr.mxu0 0.0
        %478 = vmatpush1.xpose.msra.mxu0 0.0
        %479 = vmatprep.subr.mxu0 0.0
        %480 = vmatpush1.xpose.msra.mxu0 0.0
        %481 = vmatprep.subr.mxu0 0.0
        %482 = vmatpush1.xpose.msra.mxu0 0.0
        %483 = vmatprep.subr.mxu0 0.0
        %484 = vmatpush1.xpose.msra.mxu0 0.0
        %485 = vmatprep.subr.mxu0 0.0
        %486 = vmatpush1.xpose.msra.mxu0 0.0
        %487 = vmatprep.mubr.f32.mxu0 0.0
        %488 = vmatmul.mubr.f32.gmra.mrb[0].mxu0 %v418
        %v489 = vpop.f32.mrb[0].mxu0
        %v490 = vadd.f32 0.0, %v489
        %v491 = vpop.f32.mrb[0].mxu0
        %492 = vdwg.mxu0
        %v494 = vsel %vm340, %v330, 0
        %v497 = vsel %vm340, %v334, 0
        %499 = vmatprep.subr.mxu0 0.0
        %500 = vmatpush1.xpose.msra.mxu0 %v497
        %501 = vmatprep.subr.mxu0 0.0
        %502 = vmatpush1.xpose.msra.mxu0 0.0
        %503 = vmatprep.subr.mxu0 0.0
        %504 = vmatpush1.xpose.msra.mxu0 0.0
        %505 = vmatprep.subr.mxu0 0.0
        %506 = vmatpush1.xpose.msra.mxu0 0.0
        %507 = vmatprep.subr.mxu0 0.0
        %508 = vmatpush1.xpose.msra.mxu0 0.0
        %509 = vmatprep.subr.mxu0 0.0
        %510 = vmatpush1.xpose.msra.mxu0 0.0
        %511 = vmatprep.subr.mxu0 0.0
        %512 = vmatpush1.xpose.msra.mxu0 0.0
        %513 = vmatprep.subr.mxu0 0.0
        %514 = vmatpush1.xpose.msra.mxu0 0.0
        %515 = vmatprep.subr.mxu0 0.0
        %516 = vmatpush1.xpose.msra.mxu0 0.0
        %517 = vmatprep.subr.mxu0 0.0
        %518 = vmatpush1.xpose.msra.mxu0 0.0
        %519 = vmatprep.subr.mxu0 0.0
        %520 = vmatpush1.xpose.msra.mxu0 0.0
        %521 = vmatprep.subr.mxu0 0.0
        %522 = vmatpush1.xpose.msra.mxu0 0.0
        %523 = vmatprep.subr.mxu0 0.0
        %524 = vmatpush1.xpose.msra.mxu0 0.0
        %525 = vmatprep.subr.mxu0 0.0
        %526 = vmatpush1.xpose.msra.mxu0 0.0
        %527 = vmatprep.subr.mxu0 0.0
        %528 = vmatpush1.xpose.msra.mxu0 0.0
        %529 = vmatprep.subr.mxu0 0.0
        %530 = vmatpush1.xpose.msra.mxu0 0.0
        %531 = vmatprep.subr.mxu0 0.0
        %532 = vmatpush1.xpose.msra.mxu0 0.0
        %533 = vmatprep.subr.mxu0 0.0
        %534 = vmatpush1.xpose.msra.mxu0 0.0
        %535 = vmatprep.subr.mxu0 0.0
        %536 = vmatpush1.xpose.msra.mxu0 0.0
        %537 = vmatprep.subr.mxu0 0.0
        %538 = vmatpush1.xpose.msra.mxu0 0.0
        %539 = vmatprep.subr.mxu0 0.0
        %540 = vmatpush1.xpose.msra.mxu0 0.0
        %541 = vmatprep.subr.mxu0 0.0
        %542 = vmatpush1.xpose.msra.mxu0 0.0
        %543 = vmatprep.subr.mxu0 0.0
        %544 = vmatpush1.xpose.msra.mxu0 0.0
        %545 = vmatprep.subr.mxu0 0.0
        %546 = vmatpush1.xpose.msra.mxu0 0.0
        %547 = vmatprep.subr.mxu0 0.0
        %548 = vmatpush1.xpose.msra.mxu0 0.0
        %549 = vmatprep.subr.mxu0 0.0
        %550 = vmatpush1.xpose.msra.mxu0 0.0
        %551 = vmatprep.subr.mxu0 0.0
        %552 = vmatpush1.xpose.msra.mxu0 0.0
        %553 = vmatprep.subr.mxu0 0.0
        %554 = vmatpush1.xpose.msra.mxu0 0.0
        %555 = vmatprep.subr.mxu0 0.0
        %556 = vmatpush1.xpose.msra.mxu0 0.0
        %557 = vmatprep.subr.mxu0 0.0
        %558 = vmatpush1.xpose.msra.mxu0 0.0
        %559 = vmatprep.subr.mxu0 0.0
        %560 = vmatpush1.xpose.msra.mxu0 0.0
        %561 = vmatprep.subr.mxu0 0.0
        %562 = vmatpush1.xpose.msra.mxu0 0.0
        %563 = vmatprep.mubr.f32.mxu0 0.0
        %564 = vmatmul.mubr.f32.gmra.mrb[0].mxu0 %v494
        %v565 = vpop.f32.mrb[0].mxu0
        %v566 = vadd.f32 0.0, %v565
        %v567 = vpop.f32.mrb[0].mxu0
        %568 = vdwg.mxu0
        %v570 = vsel %vm340, %v331, 0
        %v573 = vsel %vm340, %v335, 0
        %575 = vmatprep.subr.mxu0 0.0
        %576 = vmatpush1.xpose.msra.mxu0 %v573
        %577 = vmatprep.subr.mxu0 0.0
        %578 = vmatpush1.xpose.msra.mxu0 0.0
        %579 = vmatprep.subr.mxu0 0.0
        %580 = vmatpush1.xpose.msra.mxu0 0.0
        %581 = vmatprep.subr.mxu0 0.0
        %582 = vmatpush1.xpose.msra.mxu0 0.0
        %583 = vmatprep.subr.mxu0 0.0
        %584 = vmatpush1.xpose.msra.mxu0 0.0
        %585 = vmatprep.subr.mxu0 0.0
        %586 = vmatpush1.xpose.msra.mxu0 0.0
        %587 = vmatprep.subr.mxu0 0.0
        %588 = vmatpush1.xpose.msra.mxu0 0.0
        %589 = vmatprep.subr.mxu0 0.0
        %590 = vmatpush1.xpose.msra.mxu0 0.0
        %591 = vmatprep.subr.mxu0 0.0
        %592 = vmatpush1.xpose.msra.mxu0 0.0
        %593 = vmatprep.subr.mxu0 0.0
        %594 = vmatpush1.xpose.msra.mxu0 0.0
        %595 = vmatprep.subr.mxu0 0.0
        %596 = vmatpush1.xpose.msra.mxu0 0.0
        %597 = vmatprep.subr.mxu0 0.0
        %598 = vmatpush1.xpose.msra.mxu0 0.0
        %599 = vmatprep.subr.mxu0 0.0
        %600 = vmatpush1.xpose.msra.mxu0 0.0
        %601 = vmatprep.subr.mxu0 0.0
        %602 = vmatpush1.xpose.msra.mxu0 0.0
        %603 = vmatprep.subr.mxu0 0.0
        %604 = vmatpush1.xpose.msra.mxu0 0.0
        %605 = vmatprep.subr.mxu0 0.0
        %606 = vmatpush1.xpose.msra.mxu0 0.0
        %607 = vmatprep.subr.mxu0 0.0
        %608 = vmatpush1.xpose.msra.mxu0 0.0
        %609 = vmatprep.subr.mxu0 0.0
        %610 = vmatpush1.xpose.msra.mxu0 0.0
        %611 = vmatprep.subr.mxu0 0.0
        %612 = vmatpush1.xpose.msra.mxu0 0.0
        %613 = vmatprep.subr.mxu0 0.0
        %614 = vmatpush1.xpose.msra.mxu0 0.0
        %615 = vmatprep.subr.mxu0 0.0
        %616 = vmatpush1.xpose.msra.mxu0 0.0
        %617 = vmatprep.subr.mxu0 0.0
        %618 = vmatpush1.xpose.msra.mxu0 0.0
        %619 = vmatprep.subr.mxu0 0.0
        %620 = vmatpush1.xpose.msra.mxu0 0.0
        %621 = vmatprep.subr.mxu0 0.0
        %622 = vmatpush1.xpose.msra.mxu0 0.0
        %623 = vmatprep.subr.mxu0 0.0
        %624 = vmatpush1.xpose.msra.mxu0 0.0
        %625 = vmatprep.subr.mxu0 0.0
        %626 = vmatpush1.xpose.msra.mxu0 0.0
        %627 = vmatprep.subr.mxu0 0.0
        %628 = vmatpush1.xpose.msra.mxu0 0.0
        %629 = vmatprep.subr.mxu0 0.0
        %630 = vmatpush1.xpose.msra.mxu0 0.0
        %631 = vmatprep.subr.mxu0 0.0
        %632 = vmatpush1.xpose.msra.mxu0 0.0
        %633 = vmatprep.subr.mxu0 0.0
        %634 = vmatpush1.xpose.msra.mxu0 0.0
        %635 = vmatprep.subr.mxu0 0.0
        %636 = vmatpush1.xpose.msra.mxu0 0.0
        %637 = vmatprep.subr.mxu0 0.0
        %638 = vmatpush1.xpose.msra.mxu0 0.0
        %639 = vmatprep.mubr.f32.mxu0 0.0
        %640 = vmatmul.mubr.f32.gmra.mrb[0].mxu0 %v570
        %v641 = vpop.f32.mrb[0].mxu0
        %v642 = vadd.f32 0.0, %v641
        %v643 = vpop.f32.mrb[0].mxu0
        %644 = vdwg.mxu0
        %v645 = vmul.f32 %v414, 0.17677669
        %v646 = vmul.f32 %v490, 0.17677669
        %v647 = vmul.f32 %v566, 0.17677669
        %v648 = vmul.f32 %v642, 0.17677669
        %vm649 = vcmask 64512
        %v650 = vsel %vm649, %v645, -inf
        %651 = vmax.xlane.f32.xlu0 %v650
        %v652 = vpop.xlane.xlu0 %651
        %v653 = vsel %vm649, %v646, -inf
        %654 = vmax.xlane.f32.xlu0 %v653
        %v655 = vpop.xlane.xlu0 %654
        %v656 = vsel %vm649, %v647, -inf
        %657 = vmax.xlane.f32.xlu0 %v656
        %v658 = vpop.xlane.xlu0 %657
        %v659 = vsel %vm649, %v648, -inf
        %660 = vmax.xlane.f32.xlu0 %v659
        %v661 = vpop.xlane.xlu0 %660
        %v662 = vsub.f32 %v645, %v652
        %v663 = vsub.f32 %v646, %v655
        %v664 = vsub.f32 %v647, %v658
        %v665 = vsub.f32 %v648, %v661
        %v666 = vmul.f32 %v662, 1.442695
        %v667 = vpow.pop %v666
        %v668 = vmul.f32 %v663, 1.442695
        %v669 = vpow.pop %v668
        %v670 = vmul.f32 %v664, 1.442695
        %v671 = vpow.pop %v670
        %v672 = vmul.f32 %v665, 1.442695
        %v673 = vpow.pop %v672
        %v674 = vsel %vm649, %v667, 0.0
        %675 = vadd.xlane.f32.xlu0 %v674
        %v676 = vpop.xlane.xlu0 %675
        %v677 = vsel %vm649, %v669, 0.0
        %678 = vadd.xlane.f32.xlu0 %v677
        %v679 = vpop.xlane.xlu0 %678
        %v680 = vsel %vm649, %v671, 0.0
        %681 = vadd.xlane.f32.xlu0 %v680
        %v682 = vpop.xlane.xlu0 %681
        %v683 = vsel %vm649, %v673, 0.0
        %684 = vadd.xlane.f32.xlu0 %v683
        %v685 = vpop.xlane.xlu0 %684
        %v686 = vrcp.pop %v676
        %v687 = vrcp.pop %v679
        %v688 = vrcp.pop %v682
        %v689 = vrcp.pop %v685
        %v690 = vmul.f32 %v667, %v686
        %v691 = vmul.f32 %v669, %v687
        %v692 = vmul.f32 %v671, %v688
        %v693 = vmul.f32 %v673, %v689
        %694 = vst.msk [vmem:[%s322] sm:$0xff] %vm649, %v690
        %695 = vst.msk [vmem:[%s322 + $0x8] sm:$0xff] %vm649, %v691
        %696 = vst.msk [vmem:[%s322 + $0x10] sm:$0xff] %vm649, %v692
        %697 = vst.msk [vmem:[%s322 + $0x18] sm:$0xff] %vm649, %v693
        %v699 = vsel %vm649, %v690, 0
        %701 = vmatprep.subr.mxu0 0.0
        %702 = vmatpush1.msra.mxu0 %v336
        %703 = vmatprep.subr.mxu0 0.0
        %704 = vmatpush1.msra.mxu0 0.0
        %705 = vmatprep.subr.mxu0 0.0
        %706 = vmatpush1.msra.mxu0 0.0
        %707 = vmatprep.subr.mxu0 0.0
        %708 = vmatpush1.msra.mxu0 0.0
        %709 = vmatprep.subr.mxu0 0.0
        %710 = vmatpush1.msra.mxu0 0.0
        %711 = vmatprep.subr.mxu0 0.0
        %712 = vmatpush1.msra.mxu0 0.0
        %713 = vmatprep.subr.mxu0 0.0
        %714 = vmatpush1.msra.mxu0 0.0
        %715 = vmatprep.subr.mxu0 0.0
        %716 = vmatpush1.msra.mxu0 0.0
        %717 = vmatprep.subr.mxu0 0.0
        %718 = vmatpush1.msra.mxu0 0.0
        %719 = vmatprep.subr.mxu0 0.0
        %720 = vmatpush1.msra.mxu0 0.0
        %721 = vmatprep.subr.mxu0 0.0
        %722 = vmatpush1.msra.mxu0 0.0
        %723 = vmatprep.subr.mxu0 0.0
        %724 = vmatpush1.msra.mxu0 0.0
        %725 = vmatprep.subr.mxu0 0.0
        %726 = vmatpush1.msra.mxu0 0.0
        %727 = vmatprep.subr.mxu0 0.0
        %728 = vmatpush1.msra.mxu0 0.0
        %729 = vmatprep.subr.mxu0 0.0
        %730 = vmatpush1.msra.mxu0 0.0
        %731 = vmatprep.subr.mxu0 0.0
        %732 = vmatpush1.msra.mxu0 0.0
        %733 = vmatprep.subr.mxu0 0.0
        %734 = vmatpush1.msra.mxu0 0.0
        %735 = vmatprep.subr.mxu0 0.0
        %736 = vmatpush1.msra.mxu0 0.0
        %737 = vmatprep.subr.mxu0 0.0
        %738 = vmatpush1.msra.mxu0 0.0
        %739 = vmatprep.subr.mxu0 0.0
        %740 = vmatpush1.msra.mxu0 0.0
        %741 = vmatprep.subr.mxu0 0.0
        %742 = vmatpush1.msra.mxu0 0.0
        %743 = vmatprep.subr.mxu0 0.0
        %744 = vmatpush1.msra.mxu0 0.0
        %745 = vmatprep.subr.mxu0 0.0
        %746 = vmatpush1.msra.mxu0 0.0
        %747 = vmatprep.subr.mxu0 0.0
        %748 = vmatpush1.msra.mxu0 0.0
        %749 = vmatprep.subr.mxu0 0.0
        %750 = vmatpush1.msra.mxu0 0.0
        %751 = vmatprep.subr.mxu0 0.0
        %752 = vmatpush1.msra.mxu0 0.0
        %753 = vmatprep.subr.mxu0 0.0
        %754 = vmatpush1.msra.mxu0 0.0
        %755 = vmatprep.subr.mxu0 0.0
        %756 = vmatpush1.msra.mxu0 0.0
        %757 = vmatprep.subr.mxu0 0.0
        %758 = vmatpush1.msra.mxu0 0.0
        %759 = vmatprep.subr.mxu0 0.0
        %760 = vmatpush1.msra.mxu0 0.0
        %761 = vmatprep.subr.mxu0 0.0
        %762 = vmatpush1.msra.mxu0 0.0
        %763 = vmatprep.subr.mxu0 0.0
        %764 = vmatpush1.msra.mxu0 0.0
        %765 = vmatprep.mubr.f32.mxu0 0.0
        %766 = vmatmul.mubr.f32.gmra.mrb[0].mxu0 %v699
        %v767 = vpop.f32.mrb[0].mxu0
        %v768 = vadd.f32 0.0, %v767
        %v769 = vpop.f32.mrb[0].mxu0
        %770 = vdwg.mxu0
        %v772 = vsel %vm649, %v691, 0
        %774 = vmatprep.subr.mxu0 0.0
        %775 = vmatpush1.msra.mxu0 %v337
        %776 = vmatprep.subr.mxu0 0.0
        %777 = vmatpush1.msra.mxu0 0.0
        %778 = vmatprep.subr.mxu0 0.0
        %779 = vmatpush1.msra.mxu0 0.0
        %780 = vmatprep.subr.mxu0 0.0
        %781 = vmatpush1.msra.mxu0 0.0
        %782 = vmatprep.subr.mxu0 0.0
        %783 = vmatpush1.msra.mxu0 0.0
        %784 = vmatprep.subr.mxu0 0.0
        %785 = vmatpush1.msra.mxu0 0.0
        %786 = vmatprep.subr.mxu0 0.0
        %787 = vmatpush1.msra.mxu0 0.0
        %788 = vmatprep.subr.mxu0 0.0
        %789 = vmatpush1.msra.mxu0 0.0
        %790 = vmatprep.subr.mxu0 0.0
        %791 = vmatpush1.msra.mxu0 0.0
        %792 = vmatprep.subr.mxu0 0.0
        %793 = vmatpush1.msra.mxu0 0.0
        %794 = vmatprep.subr.mxu0 0.0
        %795 = vmatpush1.msra.mxu0 0.0
        %796 = vmatprep.subr.mxu0 0.0
        %797 = vmatpush1.msra.mxu0 0.0
        %798 = vmatprep.subr.mxu0 0.0
        %799 = vmatpush1.msra.mxu0 0.0
        %800 = vmatprep.subr.mxu0 0.0
        %801 = vmatpush1.msra.mxu0 0.0
        %802 = vmatprep.subr.mxu0 0.0
        %803 = vmatpush1.msra.mxu0 0.0
        %804 = vmatprep.subr.mxu0 0.0
        %805 = vmatpush1.msra.mxu0 0.0
        %806 = vmatprep.subr.mxu0 0.0
        %807 = vmatpush1.msra.mxu0 0.0
        %808 = vmatprep.subr.mxu0 0.0
        %809 = vmatpush1.msra.mxu0 0.0
        %810 = vmatprep.subr.mxu0 0.0
        %811 = vmatpush1.msra.mxu0 0.0
        %812 = vmatprep.subr.mxu0 0.0
        %813 = vmatpush1.msra.mxu0 0.0
        %814 = vmatprep.subr.mxu0 0.0
        %815 = vmatpush1.msra.mxu0 0.0
        %816 = vmatprep.subr.mxu0 0.0
        %817 = vmatpush1.msra.mxu0 0.0
        %818 = vmatprep.subr.mxu0 0.0
        %819 = vmatpush1.msra.mxu0 0.0
        %820 = vmatprep.subr.mxu0 0.0
        %821 = vmatpush1.msra.mxu0 0.0
        %822 = vmatprep.subr.mxu0 0.0
        %823 = vmatpush1.msra.mxu0 0.0
        %824 = vmatprep.subr.mxu0 0.0
        %825 = vmatpush1.msra.mxu0 0.0
        %826 = vmatprep.subr.mxu0 0.0
        %827 = vmatpush1.msra.mxu0 0.0
        %828 = vmatprep.subr.mxu0 0.0
        %829 = vmatpush1.msra.mxu0 0.0
        %830 = vmatprep.subr.mxu0 0.0
        %831 = vmatpush1.msra.mxu0 0.0
        %832 = vmatprep.subr.mxu0 0.0
        %833 = vmatpush1.msra.mxu0 0.0
        %834 = vmatprep.subr.mxu0 0.0
        %835 = vmatpush1.msra.mxu0 0.0
        %836 = vmatprep.subr.mxu0 0.0
        %837 = vmatpush1.msra.mxu0 0.0
        %838 = vmatprep.mubr.f32.mxu0 0.0
        %839 = vmatmul.mubr.f32.gmra.mrb[0].mxu0 %v772
        %v840 = vpop.f32.mrb[0].mxu0
        %v841 = vadd.f32 0.0, %v840
        %v842 = vpop.f32.mrb[0].mxu0
        %843 = vdwg.mxu0
        %v845 = vsel %vm649, %v692, 0
        %847 = vmatprep.subr.mxu0 0.0
        %848 = vmatpush1.msra.mxu0 %v338
        %849 = vmatprep.subr.mxu0 0.0
        %850 = vmatpush1.msra.mxu0 0.0
        %851 = vmatprep.subr.mxu0 0.0
        %852 = vmatpush1.msra.mxu0 0.0
        %853 = vmatprep.subr.mxu0 0.0
        %854 = vmatpush1.msra.mxu0 0.0
        %855 = vmatprep.subr.mxu0 0.0
        %856 = vmatpush1.msra.mxu0 0.0
        %857 = vmatprep.subr.mxu0 0.0
        %858 = vmatpush1.msra.mxu0 0.0
        %859 = vmatprep.subr.mxu0 0.0
        %860 = vmatpush1.msra.mxu0 0.0
        %861 = vmatprep.subr.mxu0 0.0
        %862 = vmatpush1.msra.mxu0 0.0
        %863 = vmatprep.subr.mxu0 0.0
        %864 = vmatpush1.msra.mxu0 0.0
        %865 = vmatprep.subr.mxu0 0.0
        %866 = vmatpush1.msra.mxu0 0.0
        %867 = vmatprep.subr.mxu0 0.0
        %868 = vmatpush1.msra.mxu0 0.0
        %869 = vmatprep.subr.mxu0 0.0
        %870 = vmatpush1.msra.mxu0 0.0
        %871 = vmatprep.subr.mxu0 0.0
        %872 = vmatpush1.msra.mxu0 0.0
        %873 = vmatprep.subr.mxu0 0.0
        %874 = vmatpush1.msra.mxu0 0.0
        %875 = vmatprep.subr.mxu0 0.0
        %876 = vmatpush1.msra.mxu0 0.0
        %877 = vmatprep.subr.mxu0 0.0
        %878 = vmatpush1.msra.mxu0 0.0
        %879 = vmatprep.subr.mxu0 0.0
        %880 = vmatpush1.msra.mxu0 0.0
        %881 = vmatprep.subr.mxu0 0.0
        %882 = vmatpush1.msra.mxu0 0.0
        %883 = vmatprep.subr.mxu0 0.0
        %884 = vmatpush1.msra.mxu0 0.0
        %885 = vmatprep.subr.mxu0 0.0
        %886 = vmatpush1.msra.mxu0 0.0
        %887 = vmatprep.subr.mxu0 0.0
        %888 = vmatpush1.msra.mxu0 0.0
        %889 = vmatprep.subr.mxu0 0.0
        %890 = vmatpush1.msra.mxu0 0.0
        %891 = vmatprep.subr.mxu0 0.0
        %892 = vmatpush1.msra.mxu0 0.0
        %893 = vmatprep.subr.mxu0 0.0
        %894 = vmatpush1.msra.mxu0 0.0
        %895 = vmatprep.subr.mxu0 0.0
        %896 = vmatpush1.msra.mxu0 0.0
        %897 = vmatprep.subr.mxu0 0.0
        %898 = vmatpush1.msra.mxu0 0.0
        %899 = vmatprep.subr.mxu0 0.0
        %900 = vmatpush1.msra.mxu0 0.0
        %901 = vmatprep.subr.mxu0 0.0
        %902 = vmatpush1.msra.mxu0 0.0
        %903 = vmatprep.subr.mxu0 0.0
        %904 = vmatpush1.msra.mxu0 0.0
        %905 = vmatprep.subr.mxu0 0.0
        %906 = vmatpush1.msra.mxu0 0.0
        %907 = vmatprep.subr.mxu0 0.0
        %908 = vmatpush1.msra.mxu0 0.0
        %909 = vmatprep.subr.mxu0 0.0
        %910 = vmatpush1.msra.mxu0 0.0
        %911 = vmatprep.mubr.f32.mxu0 0.0
        %912 = vmatmul.mubr.f32.gmra.mrb[0].mxu0 %v845
        %v913 = vpop.f32.mrb[0].mxu0
        %v914 = vadd.f32 0.0, %v913
        %v915 = vpop.f32.mrb[0].mxu0
        %916 = vdwg.mxu0
        %v918 = vsel %vm649, %v693, 0
        %920 = vmatprep.subr.mxu0 0.0
        %921 = vmatpush1.msra.mxu0 %v339
        %922 = vmatprep.subr.mxu0 0.0
        %923 = vmatpush1.msra.mxu0 0.0
        %924 = vmatprep.subr.mxu0 0.0
        %925 = vmatpush1.msra.mxu0 0.0
        %926 = vmatprep.subr.mxu0 0.0
        %927 = vmatpush1.msra.mxu0 0.0
        %928 = vmatprep.subr.mxu0 0.0
        %929 = vmatpush1.msra.mxu0 0.0
        %930 = vmatprep.subr.mxu0 0.0
        %931 = vmatpush1.msra.mxu0 0.0
        %932 = vmatprep.subr.mxu0 0.0
        %933 = vmatpush1.msra.mxu0 0.0
        %934 = vmatprep.subr.mxu0 0.0
        %935 = vmatpush1.msra.mxu0 0.0
        %936 = vmatprep.subr.mxu0 0.0
        %937 = vmatpush1.msra.mxu0 0.0
        %938 = vmatprep.subr.mxu0 0.0
        %939 = vmatpush1.msra.mxu0 0.0
        %940 = vmatprep.subr.mxu0 0.0
        %941 = vmatpush1.msra.mxu0 0.0
        %942 = vmatprep.subr.mxu0 0.0
        %943 = vmatpush1.msra.mxu0 0.0
        %944 = vmatprep.subr.mxu0 0.0
        %945 = vmatpush1.msra.mxu0 0.0
        %946 = vmatprep.subr.mxu0 0.0
        %947 = vmatpush1.msra.mxu0 0.0
        %948 = vmatprep.subr.mxu0 0.0
        %949 = vmatpush1.msra.mxu0 0.0
        %950 = vmatprep.subr.mxu0 0.0
        %951 = vmatpush1.msra.mxu0 0.0
        %952 = vmatprep.subr.mxu0 0.0
        %953 = vmatpush1.msra.mxu0 0.0
        %954 = vmatprep.subr.mxu0 0.0
        %955 = vmatpush1.msra.mxu0 0.0
        %956 = vmatprep.subr.mxu0 0.0
        %957 = vmatpush1.msra.mxu0 0.0
        %958 = vmatprep.subr.mxu0 0.0
        %959 = vmatpush1.msra.mxu0 0.0
        %960 = vmatprep.subr.mxu0 0.0
        %961 = vmatpush1.msra.mxu0 0.0
        %962 = vmatprep.subr.mxu0 0.0
        %963 = vmatpush1.msra.mxu0 0.0
        %964 = vmatprep.subr.mxu0 0.0
        %965 = vmatpush1.msra.mxu0 0.0
        %966 = vmatprep.subr.mxu0 0.0
        %967 = vmatpush1.msra.mxu0 0.0
        %968 = vmatprep.subr.mxu0 0.0
        %969 = vmatpush1.msra.mxu0 0.0
        %970 = vmatprep.subr.mxu0 0.0
        %971 = vmatpush1.msra.mxu0 0.0
        %972 = vmatprep.subr.mxu0 0.0
        %973 = vmatpush1.msra.mxu0 0.0
        %974 = vmatprep.subr.mxu0 0.0
        %975 = vmatpush1.msra.mxu0 0.0
        %976 = vmatprep.subr.mxu0 0.0
        %977 = vmatpush1.msra.mxu0 0.0
        %978 = vmatprep.subr.mxu0 0.0
        %979 = vmatpush1.msra.mxu0 0.0
        %980 = vmatprep.subr.mxu0 0.0
        %981 = vmatpush1.msra.mxu0 0.0
        %982 = vmatprep.subr.mxu0 0.0
        %983 = vmatpush1.msra.mxu0 0.0
        %984 = vmatprep.mubr.f32.mxu0 0.0
        %985 = vmatmul.mubr.f32.gmra.mrb[0].mxu0 %v918
        %v986 = vpop.f32.mrb[0].mxu0
        %v987 = vadd.f32 0.0, %v986
        %v988 = vpop.f32.mrb[0].mxu0
        %989 = vdwg.mxu0
        %990 = vst.msk [vmem:[%s315] sm:$0xff] %vm340, %v768
        %991 = vst.msk [vmem:[%s315 + $0x8] sm:$0xff] %vm340, %v841
        %992 = vst.msk [vmem:[%s315 + $0x10] sm:$0xff] %vm340, %v914
        %993 = vst.msk [vmem:[%s315 + $0x18] sm:$0xff] %vm340, %v987
        %s994 = sand.u32 %s130, 1
        %s995 = scalar_lea.sflag [#allocation4], %s994
        %s996 = sand.u32 %s130, 1
        %s997 = smul.addr %s996, 32
        %s998 = scalar_lea.vmem [#allocation8], %s997
        %s999 = sand.u32 %s158, 1
        %s1000 = scalar_lea.sflag [#allocation10], %s999
        %s1001 = sand.u32 %s158, 1
        %s1002 = smul.addr %s1001, 32
        %s1003 = scalar_lea.vmem [#allocation9], %s1002
        // Predicated region
        $region45: #{tpu_custom_call.1} parent=31 // pred_check
          %p1004 = pneg %p140
        $region46: #{tpu_custom_call.1} parent=31 // pred_check_branch
          %1006 = sbr.rel (%p1004) target = $region48
        $region47: #{tpu_custom_call.1} parent=31 // pred_region
          %s1007 = smul.u32 4, %s32
          %s1009 = ssub.s32 512, 512
          %1010 = vsyncadd %s995, %s1009
          %s1011 = sadd.s32 %s33, %s1007
          %s1012 = smul.addr %s1011, 128
          %s1013 = scalar_lea.hbm %s3, %s1012
          %s1014 = sshll.u32 %s998, 4
          %s1015 = int_to_ptr.vmem [resolvable:$true] %s1014
          %1020 = dma.vmem_to_hbm [thread:$0]  %s1015, 512, %s1013, %s995, 128, 128, 8
        $region48: #{tpu_custom_call.1} parent=31 // pred_fallthru
          _
        // Predicated region
        $region49: #{tpu_custom_call.1} parent=31 // pred_check
          %p1021 = pneg %p168
        $region50: #{tpu_custom_call.1} parent=31 // pred_check_branch
          %1023 = sbr.rel (%p1021) target = $region52
        $region51: #{tpu_custom_call.1} parent=31 // pred_region
          %s1024 = smul.u32 4, %s32
          %s1026 = ssub.s32 512, 512
          %1027 = vsyncadd %s1000, %s1026
          %s1028 = sadd.s32 %s33, %s1024
          %s1029 = smul.addr %s1028, 128
          %s1030 = scalar_lea.hbm %s4, %s1029
          %s1031 = sshll.u32 %s1003, 4
          %s1032 = int_to_ptr.vmem [resolvable:$true] %s1031
          %1037 = dma.vmem_to_hbm [thread:$0]  %s1032, 512, %s1030, %s1000, 128, 128, 8
        $region52: #{tpu_custom_call.1} parent=31 // pred_fallthru
          _
      $region32: #{tpu_custom_call.1} parent=5 // pred_fallthru
        _
      %p1038 = scmp.le.s32.totalorder 2, %s23
      // Predicated region
      $region53: #{tpu_custom_call.1} parent=5 // pred_check
        %p1039 = pneg %p1038
      $region54: #{tpu_custom_call.1} parent=5 // pred_check_branch
        %1041 = sbr.rel (%p1039) target = $region56
      $region55: #{tpu_custom_call.1} parent=5 // pred_region
        %s1042 = ssub.s32 %s23, 2
        // Predicated region
        $region57: #{tpu_custom_call.1} parent=55 // pred_check
          %p1043 = pneg %p146
        $region58: #{tpu_custom_call.1} parent=55 // pred_check_branch
          %1045 = sbr.rel (%p1043) target = $region60
        $region59: #{tpu_custom_call.1} parent=55 // pred_region
          %s1046 = sand.u32 %s131, 1
          %s1047 = scalar_lea.sflag [#allocation4], %s1046
          %s1048 = sand.u32 %s131, 1
          %s1049 = smul.addr %s1048, 32
          %s1050 = scalar_lea.vmem [#allocation8], %s1049
          %1051 = dma.done %s1047, 512
        $region60: #{tpu_custom_call.1} parent=55 // pred_fallthru
          _
        // Predicated region
        $region61: #{tpu_custom_call.1} parent=55 // pred_check
          %p1052 = pneg %p174
        $region62: #{tpu_custom_call.1} parent=55 // pred_check_branch
          %1054 = sbr.rel (%p1052) target = $region64
        $region63: #{tpu_custom_call.1} parent=55 // pred_region
          %s1055 = sand.u32 %s159, 1
          %s1056 = scalar_lea.sflag [#allocation10], %s1055
          %s1057 = sand.u32 %s159, 1
          %s1058 = smul.addr %s1057, 32
          %s1059 = scalar_lea.vmem [#allocation9], %s1058
          %1060 = dma.done %s1056, 512
        $region64: #{tpu_custom_call.1} parent=55 // pred_fallthru
          _
      $region56: #{tpu_custom_call.1} parent=5 // pred_fallthru
        _
    $region6: #{tpu_custom_call.1} parent=1 // loop_footer
      %s27 = sadd.s32 1, %s23
    $region7: #{tpu_custom_call.1} parent=1 // loop_footer_branch
      %22 = sbr.rel target = $region3
    $region8: #{tpu_custom_call.1} parent=1 // loop_exit
      _
    %1061 = vsyncpa [#allocation3], 1
    %s1062 = scalar_lea.sflag [#allocation3], 1
    %1063 = vsyncpa %s1062, 1
    %1064 = vsyncpa [#allocation6], 1
    %s1065 = scalar_lea.sflag [#allocation6], 1
    %1066 = vsyncpa %s1065, 1
    %1067 = vsyncpa [#allocation4], 1
    %s1068 = scalar_lea.sflag [#allocation4], 1
    %1069 = vsyncpa %s1068, 1
    %1070 = vsyncpa [#allocation10], 1
    %s1071 = scalar_lea.sflag [#allocation10], 1
    %1072 = vsyncpa %s1071, 1

</llo_original>
